<compile_context>
chip_gen: v7x
topology: tpu7x:2x2x1
jax: 0.10.0
libtpu: 0.0.40
codegen_flags: <defaults>
</compile_context>

<pallas_src>
import jax
import jax.numpy as jnp
from jax.experimental import pallas as pl
from jax.experimental.pallas import tpu as pltpu

# Model hyper-parameters implied by the no-GPU branch of StrokeRecoveryModel.
NIN = 64          # fake_cnn feature size
NHIDDEN = 1       # nHidden=1 in the fake branch
NOUT = 4          # vocab_size
NGATES = 4 * NHIDDEN


def lstm_dir_kernel(gate_const_ref, whh_ref, wemb_ref, out_ref):
    """One LSTM direction + fused output projection.

    Grid point 0 = forward direction, grid point 1 = backward direction.
    gate_const_ref: (1, 4H)   W_ih @ ones + b_ih + b_hh  (input is all-ones)
    whh_ref:        (1, 4H)   recurrent weight row (valid because H == 1)
    wemb_ref:       (1, NOUT) output-projection column for this direction
    out_ref:        (T, B, NOUT) this direction's contribution to the output
    """
    T, B, _ = out_ref.shape
    H = NHIDDEN

    is_fwd = pl.program_id(0) == 0

    # Hoist all loop-invariant reads / broadcasts out of the serial chain.
    gate_const = gate_const_ref[...]      # (1, 4H)
    whh_vec = whh_ref[...]                # (1, 4H)
    wemb_vec = wemb_ref[...]              # (1, NOUT)

    h = jnp.zeros((B, H), jnp.float32)
    c = jnp.zeros((B, H), jnp.float32)

    # T is static & tiny -> fully unrolled; only (h, c) live across iterations.
    for s in range(T):
        t = jnp.where(is_fwd, jnp.int32(s), jnp.int32(T - 1 - s))

        # H == 1: hidden contribution is a per-batch scalar times the 4H row.
        gates = gate_const + h * whh_vec          # (B, 4H)

        # Two whole-vector EUP passes, then pick PyTorch's i, f, g, o columns.
        sig = jax.nn.sigmoid(gates)
        th = jnp.tanh(gates)
        i_g = sig[:, 0 * H:1 * H]
        f_g = sig[:, 1 * H:2 * H]
        g_g = th[:, 2 * H:3 * H]
        o_g = sig[:, 3 * H:4 * H]

        c = f_g * c + i_g * g_g
        h = o_g * jnp.tanh(c)

        # Fused Linear(2H -> NOUT) contribution of this direction.
        out_ref[t] = h * wemb_vec                 # (B, 1) * (1, NOUT) -> (B, NOUT)


def init_params(key):
    """Deterministic synthetic parameters matching the PyTorch module shapes."""
    ks = jax.random.split(key, 10)
    s = 0.1
    wih_f = s * jax.random.normal(ks[0], (NGATES, NIN), jnp.float32)
    whh_f = s * jax.random.normal(ks[1], (NGATES, NHIDDEN), jnp.float32)
    b_f = (s * jax.random.normal(ks[2], (1, NGATES), jnp.float32)
           + s * jax.random.normal(ks[3], (1, NGATES), jnp.float32))  # b_ih + b_hh
    wih_b = s * jax.random.normal(ks[4], (NGATES, NIN), jnp.float32)
    whh_b = s * jax.random.normal(ks[5], (NGATES, NHIDDEN), jnp.float32)
    b_b = (s * jax.random.normal(ks[6], (1, NGATES), jnp.float32)
           + s * jax.random.normal(ks[7], (1, NGATES), jnp.float32))
    wemb = s * jax.random.normal(ks[8], (NOUT, 2 * NHIDDEN), jnp.float32)
    bemb = s * jax.random.normal(ks[9], (1, NOUT), jnp.float32)
    return (wih_f, whh_f, b_f, wih_b, whh_b, b_b, wemb, bemb)


def stroke_recovery_forward(img, lengths, params):
    """Equivalent of StrokeRecoveryModel.forward in the fake_cnn branch.

    img:     (B, C, H, W)  NCHW image (contents ignored by fake_cnn)
    lengths: (B,)          unused (the `and False` packing branch is dead code)
    returns: (T, B, NOUT) with T = W % 2 + W + 2
    """
    del lengths  # pack_padded_sequence branch is dead code in the reference
    b, _, _, w = img.shape
    T = w % 2 + w + 2

    wih_f, whh_f, b_f, wih_b, whh_b, b_b, wemb, bemb = params

    # fake_cnn output is all-ones -> x @ W_ih.T == row_sum(W_ih); fold in biases.
    # These tiny per-direction constants are the ONLY inputs the kernel needs.
    gate_const = jnp.stack([
        (jnp.sum(wih_f, axis=1) + b_f[0])[None, :],
        (jnp.sum(wih_b, axis=1) + b_b[0])[None, :],
    ])                                                                # (2, 1, 4H)
    whh_vec = jnp.stack([whh_f[:, 0][None, :], whh_b[:, 0][None, :]])  # (2, 1, 4H)
    wemb_vec = jnp.stack([wemb[:, 0][None, :],                         # fwd column
                          wemb[:, NHIDDEN][None, :]])                  # bwd column
    # TODO(synk): if this branch is ever used with real CNN features (non-ones),
    # precompute XG = einsum('tbi,gi->tbg', x, W_ih) once and feed it instead.

    partials = pl.pallas_call(
        lstm_dir_kernel,
        out_shape=jax.ShapeDtypeStruct((2, T, b, NOUT), jnp.float32),
        grid=(2,),
        in_specs=[
            pl.BlockSpec((None, 1, NGATES), lambda d: (d, 0, 0)),
            pl.BlockSpec((None, 1, NGATES), lambda d: (d, 0, 0)),
            pl.BlockSpec((None, 1, NOUT), lambda d: (d, 0, 0)),
        ],
        out_specs=pl.BlockSpec((None, T, b, NOUT), lambda d: (d, 0, 0, 0)),
        compiler_params=pltpu.CompilerParams(
            dimension_semantics=("parallel",)),
    )(gate_const, whh_vec, wemb_vec)

    # Combine the two directions and add the output bias (one tiny XLA op).
    return partials[0] + partials[1] + bemb[None, :, :]


if __name__ == "__main__":
    key = jax.random.PRNGKey(0)
    k_img, k_par = jax.random.split(key)

    # Small shapes consistent with the module: batch=2, nc=1, 16x16 image.
    img = jax.random.normal(k_img, (2, 1, 16, 16), jnp.float32)
    lengths = jnp.array([16, 12], jnp.int32)

    params = init_params(k_par)
    out = stroke_recovery_forward(img, lengths, params)
    out = jax.block_until_ready(out)

    assert out.shape == (16 % 2 + 16 + 2, 2, NOUT), out.shape
    assert out.dtype == jnp.float32
    print("KERNEL_OK")
</pallas_src>

<mosaic_0001>
module attributes {stable_mosaic.version = 11 : i64} {
  func.func @lstm_dir_kernel(%arg0: i32, %arg1: memref<1x1x4xf32, #tpu.memory_space<vmem>>, %arg2: memref<1x1x4xf32, #tpu.memory_space<vmem>>, %arg3: memref<1x1x4xf32, #tpu.memory_space<vmem>>, %arg4: memref<1x18x2x4xf32, #tpu.memory_space<vmem>>) attributes {dimension_semantics = [#tpu.dimension_semantics<parallel>], iteration_bounds = array<i64: 2>, scalar_prefetch = 0 : i64, scratch_operands = 0 : i64, tpu.core_type = #tpu.core_type<tc>, window_params = [{transform_indices = @transform_0, window_bounds = array<i64: 1, 1, 4>}, {transform_indices = @transform_1, window_bounds = array<i64: 1, 1, 4>}, {transform_indices = @transform_2, window_bounds = array<i64: 1, 1, 4>}, {transform_indices = @transform_3, window_bounds = array<i64: 1, 18, 2, 4>}]} {
    %c0_i32 = arith.constant 0 : i32
    %0 = arith.cmpi eq, %arg0, %c0_i32 : i32
    %c0 = arith.constant 0 : index
    %c0_0 = arith.constant 0 : index
    %c0_1 = arith.constant 0 : index
    %1 = vector.load %arg1[%c0, %c0_0, %c0_1] : memref<1x1x4xf32, #tpu.memory_space<vmem>>, vector<1x1x4xf32>
    %2 = vector.shape_cast %1 : vector<1x1x4xf32> to vector<1x4xf32>
    %c0_2 = arith.constant 0 : index
    %c0_3 = arith.constant 0 : index
    %c0_4 = arith.constant 0 : index
    %3 = vector.load %arg2[%c0_2, %c0_3, %c0_4] : memref<1x1x4xf32, #tpu.memory_space<vmem>>, vector<1x1x4xf32>
    %4 = vector.shape_cast %3 : vector<1x1x4xf32> to vector<1x4xf32>
    %c0_5 = arith.constant 0 : index
    %c0_6 = arith.constant 0 : index
    %c0_7 = arith.constant 0 : index
    %5 = vector.load %arg3[%c0_5, %c0_6, %c0_7] : memref<1x1x4xf32, #tpu.memory_space<vmem>>, vector<1x1x4xf32>
    %6 = vector.shape_cast %5 : vector<1x1x4xf32> to vector<1x4xf32>
    %cst = arith.constant 0.000000e+00 : f32
    %7 = vector.broadcast %cst : f32 to vector<2x1xf32>
    %cst_8 = arith.constant 0.000000e+00 : f32
    %8 = vector.broadcast %cst_8 : f32 to vector<2x1xf32>
    %c0_i32_9 = arith.constant 0 : i32
    %c17_i32 = arith.constant 17 : i32
    %9 = arith.select %0, %c0_i32_9, %c17_i32 : i32
    %10 = vector.broadcast %7 : vector<2x1xf32> to vector<2x4xf32>
    %11 = vector.broadcast %4 : vector<1x4xf32> to vector<2x4xf32>
    %12 = arith.mulf %10, %11 : vector<2x4xf32>
    %13 = vector.broadcast %2 : vector<1x4xf32> to vector<2x4xf32>
    %14 = arith.addf %13, %12 : vector<2x4xf32>
    %15 = arith.negf %14 : vector<2x4xf32>
    %16 = math.exp %15 : vector<2x4xf32>
    %cst_10 = arith.constant 1.000000e+00 : f32
    %17 = vector.broadcast %cst_10 : f32 to vector<2x4xf32>
    %18 = arith.addf %17, %16 : vector<2x4xf32>
    %19 = arith.divf %17, %18 : vector<2x4xf32>
    %20 = math.tanh %14 : vector<2x4xf32>
    %21 = vector.extract_strided_slice %19 {offsets = [0, 0], sizes = [2, 1], strides = [1, 1]} : vector<2x4xf32> to vector<2x1xf32>
    %22 = vector.extract_strided_slice %19 {offsets = [0, 1], sizes = [2, 1], strides = [1, 1]} : vector<2x4xf32> to vector<2x1xf32>
    %23 = vector.extract_strided_slice %20 {offsets = [0, 2], sizes = [2, 1], strides = [1, 1]} : vector<2x4xf32> to vector<2x1xf32>
    %24 = vector.extract_strided_slice %19 {offsets = [0, 3], sizes = [2, 1], strides = [1, 1]} : vector<2x4xf32> to vector<2x1xf32>
    %25 = arith.mulf %22, %8 : vector<2x1xf32>
    %26 = arith.mulf %21, %23 : vector<2x1xf32>
    %27 = arith.addf %25, %26 : vector<2x1xf32>
    %28 = math.tanh %27 : vector<2x1xf32>
    %29 = arith.mulf %24, %28 : vector<2x1xf32>
    %30 = vector.broadcast %29 : vector<2x1xf32> to vector<2x4xf32>
    %31 = vector.broadcast %6 : vector<1x4xf32> to vector<2x4xf32>
    %32 = arith.mulf %30, %31 : vector<2x4xf32>
    %c0_11 = arith.constant 0 : index
    %33 = arith.index_cast %9 : i32 to index
    %c0_12 = arith.constant 0 : index
    %c0_13 = arith.constant 0 : index
    %34 = vector.load %arg4[%c0_11, %33, %c0_12, %c0_13] : memref<1x18x2x4xf32, #tpu.memory_space<vmem>>, vector<1x1x2x4xf32>
    %35 = vector.shape_cast %34 : vector<1x1x2x4xf32> to vector<2x4xf32>
    %36 = vector.shape_cast %32 : vector<2x4xf32> to vector<1x1x2x4xf32>
    tpu.vector_store %arg4[%c0_11, %33, %c0_12, %c0_13], %36 {strides = array<i32>} : memref<1x18x2x4xf32, #tpu.memory_space<vmem>>, vector<1x1x2x4xf32>,
    %c1_i32 = arith.constant 1 : i32
    %c16_i32 = arith.constant 16 : i32
    %37 = arith.select %0, %c1_i32, %c16_i32 : i32
    %38 = vector.broadcast %29 : vector<2x1xf32> to vector<2x4xf32>
    %39 = vector.broadcast %4 : vector<1x4xf32> to vector<2x4xf32>
    %40 = arith.mulf %38, %39 : vector<2x4xf32>
    %41 = vector.broadcast %2 : vector<1x4xf32> to vector<2x4xf32>
    %42 = arith.addf %41, %40 : vector<2x4xf32>
    %43 = arith.negf %42 : vector<2x4xf32>
    %44 = math.exp %43 : vector<2x4xf32>
    %cst_14 = arith.constant 1.000000e+00 : f32
    %45 = vector.broadcast %cst_14 : f32 to vector<2x4xf32>
    %46 = arith.addf %45, %44 : vector<2x4xf32>
    %47 = arith.divf %45, %46 : vector<2x4xf32>
    %48 = math.tanh %42 : vector<2x4xf32>
    %49 = vector.extract_strided_slice %47 {offsets = [0, 0], sizes = [2, 1], strides = [1, 1]} : vector<2x4xf32> to vector<2x1xf32>
    %50 = vector.extract_strided_slice %47 {offsets = [0, 1], sizes = [2, 1], strides = [1, 1]} : vector<2x4xf32> to vector<2x1xf32>
    %51 = vector.extract_strided_slice %48 {offsets = [0, 2], sizes = [2, 1], strides = [1, 1]} : vector<2x4xf32> to vector<2x1xf32>
    %52 = vector.extract_strided_slice %47 {offsets = [0, 3], sizes = [2, 1], strides = [1, 1]} : vector<2x4xf32> to vector<2x1xf32>
    %53 = arith.mulf %50, %27 : vector<2x1xf32>
    %54 = arith.mulf %49, %51 : vector<2x1xf32>
    %55 = arith.addf %53, %54 : vector<2x1xf32>
    %56 = math.tanh %55 : vector<2x1xf32>
    %57 = arith.mulf %52, %56 : vector<2x1xf32>
    %58 = vector.broadcast %57 : vector<2x1xf32> to vector<2x4xf32>
    %59 = vector.broadcast %6 : vector<1x4xf32> to vector<2x4xf32>
    %60 = arith.mulf %58, %59 : vector<2x4xf32>
    %c0_15 = arith.constant 0 : index
    %61 = arith.index_cast %37 : i32 to index
    %c0_16 = arith.constant 0 : index
    %c0_17 = arith.constant 0 : index
    %62 = vector.load %arg4[%c0_15, %61, %c0_16, %c0_17] : memref<1x18x2x4xf32, #tpu.memory_space<vmem>>, vector<1x1x2x4xf32>
    %63 = vector.shape_cast %62 : vector<1x1x2x4xf32> to vector<2x4xf32>
    %64 = vector.shape_cast %60 : vector<2x4xf32> to vector<1x1x2x4xf32>
    tpu.vector_store %arg4[%c0_15, %61, %c0_16, %c0_17], %64 {strides = array<i32>} : memref<1x18x2x4xf32, #tpu.memory_space<vmem>>, vector<1x1x2x4xf32>,
    %c2_i32 = arith.constant 2 : i32
    %c15_i32 = arith.constant 15 : i32
    %65 = arith.select %0, %c2_i32, %c15_i32 : i32
    %66 = vector.broadcast %57 : vector<2x1xf32> to vector<2x4xf32>
    %67 = vector.broadcast %4 : vector<1x4xf32> to vector<2x4xf32>
    %68 = arith.mulf %66, %67 : vector<2x4xf32>
    %69 = vector.broadcast %2 : vector<1x4xf32> to vector<2x4xf32>
    %70 = arith.addf %69, %68 : vector<2x4xf32>
    %71 = arith.negf %70 : vector<2x4xf32>
    %72 = math.exp %71 : vector<2x4xf32>
    %cst_18 = arith.constant 1.000000e+00 : f32
    %73 = vector.broadcast %cst_18 : f32 to vector<2x4xf32>
    %74 = arith.addf %73, %72 : vector<2x4xf32>
    %75 = arith.divf %73, %74 : vector<2x4xf32>
    %76 = math.tanh %70 : vector<2x4xf32>
    %77 = vector.extract_strided_slice %75 {offsets = [0, 0], sizes = [2, 1], strides = [1, 1]} : vector<2x4xf32> to vector<2x1xf32>
    %78 = vector.extract_strided_slice %75 {offsets = [0, 1], sizes = [2, 1], strides = [1, 1]} : vector<2x4xf32> to vector<2x1xf32>
    %79 = vector.extract_strided_slice %76 {offsets = [0, 2], sizes = [2, 1], strides = [1, 1]} : vector<2x4xf32> to vector<2x1xf32>
    %80 = vector.extract_strided_slice %75 {offsets = [0, 3], sizes = [2, 1], strides = [1, 1]} : vector<2x4xf32> to vector<2x1xf32>
    %81 = arith.mulf %78, %55 : vector<2x1xf32>
    %82 = arith.mulf %77, %79 : vector<2x1xf32>
    %83 = arith.addf %81, %82 : vector<2x1xf32>
    %84 = math.tanh %83 : vector<2x1xf32>
    %85 = arith.mulf %80, %84 : vector<2x1xf32>
    %86 = vector.broadcast %85 : vector<2x1xf32> to vector<2x4xf32>
    %87 = vector.broadcast %6 : vector<1x4xf32> to vector<2x4xf32>
    %88 = arith.mulf %86, %87 : vector<2x4xf32>
    %c0_19 = arith.constant 0 : index
    %89 = arith.index_cast %65 : i32 to index
    %c0_20 = arith.constant 0 : index
    %c0_21 = arith.constant 0 : index
    %90 = vector.load %arg4[%c0_19, %89, %c0_20, %c0_21] : memref<1x18x2x4xf32, #tpu.memory_space<vmem>>, vector<1x1x2x4xf32>
    %91 = vector.shape_cast %90 : vector<1x1x2x4xf32> to vector<2x4xf32>
    %92 = vector.shape_cast %88 : vector<2x4xf32> to vector<1x1x2x4xf32>
    tpu.vector_store %arg4[%c0_19, %89, %c0_20, %c0_21], %92 {strides = array<i32>} : memref<1x18x2x4xf32, #tpu.memory_space<vmem>>, vector<1x1x2x4xf32>,
    %c3_i32 = arith.constant 3 : i32
    %c14_i32 = arith.constant 14 : i32
    %93 = arith.select %0, %c3_i32, %c14_i32 : i32
    %94 = vector.broadcast %85 : vector<2x1xf32> to vector<2x4xf32>
    %95 = vector.broadcast %4 : vector<1x4xf32> to vector<2x4xf32>
    %96 = arith.mulf %94, %95 : vector<2x4xf32>
    %97 = vector.broadcast %2 : vector<1x4xf32> to vector<2x4xf32>
    %98 = arith.addf %97, %96 : vector<2x4xf32>
    %99 = arith.negf %98 : vector<2x4xf32>
    %100 = math.exp %99 : vector<2x4xf32>
    %cst_22 = arith.constant 1.000000e+00 : f32
    %101 = vector.broadcast %cst_22 : f32 to vector<2x4xf32>
    %102 = arith.addf %101, %100 : vector<2x4xf32>
    %103 = arith.divf %101, %102 : vector<2x4xf32>
    %104 = math.tanh %98 : vector<2x4xf32>
    %105 = vector.extract_strided_slice %103 {offsets = [0, 0], sizes = [2, 1], strides = [1, 1]} : vector<2x4xf32> to vector<2x1xf32>
    %106 = vector.extract_strided_slice %103 {offsets = [0, 1], sizes = [2, 1], strides = [1, 1]} : vector<2x4xf32> to vector<2x1xf32>
    %107 = vector.extract_strided_slice %104 {offsets = [0, 2], sizes = [2, 1], strides = [1, 1]} : vector<2x4xf32> to vector<2x1xf32>
    %108 = vector.extract_strided_slice %103 {offsets = [0, 3], sizes = [2, 1], strides = [1, 1]} : vector<2x4xf32> to vector<2x1xf32>
    %109 = arith.mulf %106, %83 : vector<2x1xf32>
    %110 = arith.mulf %105, %107 : vector<2x1xf32>
    %111 = arith.addf %109, %110 : vector<2x1xf32>
    %112 = math.tanh %111 : vector<2x1xf32>
    %113 = arith.mulf %108, %112 : vector<2x1xf32>
    %114 = vector.broadcast %113 : vector<2x1xf32> to vector<2x4xf32>
    %115 = vector.broadcast %6 : vector<1x4xf32> to vector<2x4xf32>
    %116 = arith.mulf %114, %115 : vector<2x4xf32>
    %c0_23 = arith.constant 0 : index
    %117 = arith.index_cast %93 : i32 to index
    %c0_24 = arith.constant 0 : index
    %c0_25 = arith.constant 0 : index
    %118 = vector.load %arg4[%c0_23, %117, %c0_24, %c0_25] : memref<1x18x2x4xf32, #tpu.memory_space<vmem>>, vector<1x1x2x4xf32>
    %119 = vector.shape_cast %118 : vector<1x1x2x4xf32> to vector<2x4xf32>
    %120 = vector.shape_cast %116 : vector<2x4xf32> to vector<1x1x2x4xf32>
    tpu.vector_store %arg4[%c0_23, %117, %c0_24, %c0_25], %120 {strides = array<i32>} : memref<1x18x2x4xf32, #tpu.memory_space<vmem>>, vector<1x1x2x4xf32>,
    %c4_i32 = arith.constant 4 : i32
    %c13_i32 = arith.constant 13 : i32
    %121 = arith.select %0, %c4_i32, %c13_i32 : i32
    %122 = vector.broadcast %113 : vector<2x1xf32> to vector<2x4xf32>
    %123 = vector.broadcast %4 : vector<1x4xf32> to vector<2x4xf32>
    %124 = arith.mulf %122, %123 : vector<2x4xf32>
    %125 = vector.broadcast %2 : vector<1x4xf32> to vector<2x4xf32>
    %126 = arith.addf %125, %124 : vector<2x4xf32>
    %127 = arith.negf %126 : vector<2x4xf32>
    %128 = math.exp %127 : vector<2x4xf32>
    %cst_26 = arith.constant 1.000000e+00 : f32
    %129 = vector.broadcast %cst_26 : f32 to vector<2x4xf32>
    %130 = arith.addf %129, %128 : vector<2x4xf32>
    %131 = arith.divf %129, %130 : vector<2x4xf32>
    %132 = math.tanh %126 : vector<2x4xf32>
    %133 = vector.extract_strided_slice %131 {offsets = [0, 0], sizes = [2, 1], strides = [1, 1]} : vector<2x4xf32> to vector<2x1xf32>
    %134 = vector.extract_strided_slice %131 {offsets = [0, 1], sizes = [2, 1], strides = [1, 1]} : vector<2x4xf32> to vector<2x1xf32>
    %135 = vector.extract_strided_slice %132 {offsets = [0, 2], sizes = [2, 1], strides = [1, 1]} : vector<2x4xf32> to vector<2x1xf32>
    %136 = vector.extract_strided_slice %131 {offsets = [0, 3], sizes = [2, 1], strides = [1, 1]} : vector<2x4xf32> to vector<2x1xf32>
    %137 = arith.mulf %134, %111 : vector<2x1xf32>
    %138 = arith.mulf %133, %135 : vector<2x1xf32>
    %139 = arith.addf %137, %138 : vector<2x1xf32>
    %140 = math.tanh %139 : vector<2x1xf32>
    %141 = arith.mulf %136, %140 : vector<2x1xf32>
    %142 = vector.broadcast %141 : vector<2x1xf32> to vector<2x4xf32>
    %143 = vector.broadcast %6 : vector<1x4xf32> to vector<2x4xf32>
    %144 = arith.mulf %142, %143 : vector<2x4xf32>
    %c0_27 = arith.constant 0 : index
    %145 = arith.index_cast %121 : i32 to index
    %c0_28 = arith.constant 0 : index
    %c0_29 = arith.constant 0 : index
    %146 = vector.load %arg4[%c0_27, %145, %c0_28, %c0_29] : memref<1x18x2x4xf32, #tpu.memory_space<vmem>>, vector<1x1x2x4xf32>
    %147 = vector.shape_cast %146 : vector<1x1x2x4xf32> to vector<2x4xf32>
    %148 = vector.shape_cast %144 : vector<2x4xf32> to vector<1x1x2x4xf32>
    tpu.vector_store %arg4[%c0_27, %145, %c0_28, %c0_29], %148 {strides = array<i32>} : memref<1x18x2x4xf32, #tpu.memory_space<vmem>>, vector<1x1x2x4xf32>,
    %c5_i32 = arith.constant 5 : i32
    %c12_i32 = arith.constant 12 : i32
    %149 = arith.select %0, %c5_i32, %c12_i32 : i32
    %150 = vector.broadcast %141 : vector<2x1xf32> to vector<2x4xf32>
    %151 = vector.broadcast %4 : vector<1x4xf32> to vector<2x4xf32>
    %152 = arith.mulf %150, %151 : vector<2x4xf32>
    %153 = vector.broadcast %2 : vector<1x4xf32> to vector<2x4xf32>
    %154 = arith.addf %153, %152 : vector<2x4xf32>
    %155 = arith.negf %154 : vector<2x4xf32>
    %156 = math.exp %155 : vector<2x4xf32>
    %cst_30 = arith.constant 1.000000e+00 : f32
    %157 = vector.broadcast %cst_30 : f32 to vector<2x4xf32>
    %158 = arith.addf %157, %156 : vector<2x4xf32>
    %159 = arith.divf %157, %158 : vector<2x4xf32>
    %160 = math.tanh %154 : vector<2x4xf32>
    %161 = vector.extract_strided_slice %159 {offsets = [0, 0], sizes = [2, 1], strides = [1, 1]} : vector<2x4xf32> to vector<2x1xf32>
    %162 = vector.extract_strided_slice %159 {offsets = [0, 1], sizes = [2, 1], strides = [1, 1]} : vector<2x4xf32> to vector<2x1xf32>
    %163 = vector.extract_strided_slice %160 {offsets = [0, 2], sizes = [2, 1], strides = [1, 1]} : vector<2x4xf32> to vector<2x1xf32>
    %164 = vector.extract_strided_slice %159 {offsets = [0, 3], sizes = [2, 1], strides = [1, 1]} : vector<2x4xf32> to vector<2x1xf32>
    %165 = arith.mulf %162, %139 : vector<2x1xf32>
    %166 = arith.mulf %161, %163 : vector<2x1xf32>
    %167 = arith.addf %165, %166 : vector<2x1xf32>
    %168 = math.tanh %167 : vector<2x1xf32>
    %169 = arith.mulf %164, %168 : vector<2x1xf32>
    %170 = vector.broadcast %169 : vector<2x1xf32> to vector<2x4xf32>
    %171 = vector.broadcast %6 : vector<1x4xf32> to vector<2x4xf32>
    %172 = arith.mulf %170, %171 : vector<2x4xf32>
    %c0_31 = arith.constant 0 : index
    %173 = arith.index_cast %149 : i32 to index
    %c0_32 = arith.constant 0 : index
    %c0_33 = arith.constant 0 : index
    %174 = vector.load %arg4[%c0_31, %173, %c0_32, %c0_33] : memref<1x18x2x4xf32, #tpu.memory_space<vmem>>, vector<1x1x2x4xf32>
    %175 = vector.shape_cast %174 : vector<1x1x2x4xf32> to vector<2x4xf32>
    %176 = vector.shape_cast %172 : vector<2x4xf32> to vector<1x1x2x4xf32>
    tpu.vector_store %arg4[%c0_31, %173, %c0_32, %c0_33], %176 {strides = array<i32>} : memref<1x18x2x4xf32, #tpu.memory_space<vmem>>, vector<1x1x2x4xf32>,
    %c6_i32 = arith.constant 6 : i32
    %c11_i32 = arith.constant 11 : i32
    %177 = arith.select %0, %c6_i32, %c11_i32 : i32
    %178 = vector.broadcast %169 : vector<2x1xf32> to vector<2x4xf32>
    %179 = vector.broadcast %4 : vector<1x4xf32> to vector<2x4xf32>
    %180 = arith.mulf %178, %179 : vector<2x4xf32>
    %181 = vector.broadcast %2 : vector<1x4xf32> to vector<2x4xf32>
    %182 = arith.addf %181, %180 : vector<2x4xf32>
    %183 = arith.negf %182 : vector<2x4xf32>
    %184 = math.exp %183 : vector<2x4xf32>
    %cst_34 = arith.constant 1.000000e+00 : f32
    %185 = vector.broadcast %cst_34 : f32 to vector<2x4xf32>
    %186 = arith.addf %185, %184 : vector<2x4xf32>
    %187 = arith.divf %185, %186 : vector<2x4xf32>
    %188 = math.tanh %182 : vector<2x4xf32>
    %189 = vector.extract_strided_slice %187 {offsets = [0, 0], sizes = [2, 1], strides = [1, 1]} : vector<2x4xf32> to vector<2x1xf32>
    %190 = vector.extract_strided_slice %187 {offsets = [0, 1], sizes = [2, 1], strides = [1, 1]} : vector<2x4xf32> to vector<2x1xf32>
    %191 = vector.extract_strided_slice %188 {offsets = [0, 2], sizes = [2, 1], strides = [1, 1]} : vector<2x4xf32> to vector<2x1xf32>
    %192 = vector.extract_strided_slice %187 {offsets = [0, 3], sizes = [2, 1], strides = [1, 1]} : vector<2x4xf32> to vector<2x1xf32>
    %193 = arith.mulf %190, %167 : vector<2x1xf32>
    %194 = arith.mulf %189, %191 : vector<2x1xf32>
    %195 = arith.addf %193, %194 : vector<2x1xf32>
    %196 = math.tanh %195 : vector<2x1xf32>
    %197 = arith.mulf %192, %196 : vector<2x1xf32>
    %198 = vector.broadcast %197 : vector<2x1xf32> to vector<2x4xf32>
    %199 = vector.broadcast %6 : vector<1x4xf32> to vector<2x4xf32>
    %200 = arith.mulf %198, %199 : vector<2x4xf32>
    %c0_35 = arith.constant 0 : index
    %201 = arith.index_cast %177 : i32 to index
    %c0_36 = arith.constant 0 : index
    %c0_37 = arith.constant 0 : index
    %202 = vector.load %arg4[%c0_35, %201, %c0_36, %c0_37] : memref<1x18x2x4xf32, #tpu.memory_space<vmem>>, vector<1x1x2x4xf32>
    %203 = vector.shape_cast %202 : vector<1x1x2x4xf32> to vector<2x4xf32>
    %204 = vector.shape_cast %200 : vector<2x4xf32> to vector<1x1x2x4xf32>
    tpu.vector_store %arg4[%c0_35, %201, %c0_36, %c0_37], %204 {strides = array<i32>} : memref<1x18x2x4xf32, #tpu.memory_space<vmem>>, vector<1x1x2x4xf32>,
    %c7_i32 = arith.constant 7 : i32
    %c10_i32 = arith.constant 10 : i32
    %205 = arith.select %0, %c7_i32, %c10_i32 : i32
    %206 = vector.broadcast %197 : vector<2x1xf32> to vector<2x4xf32>
    %207 = vector.broadcast %4 : vector<1x4xf32> to vector<2x4xf32>
    %208 = arith.mulf %206, %207 : vector<2x4xf32>
    %209 = vector.broadcast %2 : vector<1x4xf32> to vector<2x4xf32>
    %210 = arith.addf %209, %208 : vector<2x4xf32>
    %211 = arith.negf %210 : vector<2x4xf32>
    %212 = math.exp %211 : vector<2x4xf32>
    %cst_38 = arith.constant 1.000000e+00 : f32
    %213 = vector.broadcast %cst_38 : f32 to vector<2x4xf32>
    %214 = arith.addf %213, %212 : vector<2x4xf32>
    %215 = arith.divf %213, %214 : vector<2x4xf32>
    %216 = math.tanh %210 : vector<2x4xf32>
    %217 = vector.extract_strided_slice %215 {offsets = [0, 0], sizes = [2, 1], strides = [1, 1]} : vector<2x4xf32> to vector<2x1xf32>
    %218 = vector.extract_strided_slice %215 {offsets = [0, 1], sizes = [2, 1], strides = [1, 1]} : vector<2x4xf32> to vector<2x1xf32>
    %219 = vector.extract_strided_slice %216 {offsets = [0, 2], sizes = [2, 1], strides = [1, 1]} : vector<2x4xf32> to vector<2x1xf32>
    %220 = vector.extract_strided_slice %215 {offsets = [0, 3], sizes = [2, 1], strides = [1, 1]} : vector<2x4xf32> to vector<2x1xf32>
    %221 = arith.mulf %218, %195 : vector<2x1xf32>
    %222 = arith.mulf %217, %219 : vector<2x1xf32>
    %223 = arith.addf %221, %222 : vector<2x1xf32>
    %224 = math.tanh %223 : vector<2x1xf32>
    %225 = arith.mulf %220, %224 : vector<2x1xf32>
    %226 = vector.broadcast %225 : vector<2x1xf32> to vector<2x4xf32>
    %227 = vector.broadcast %6 : vector<1x4xf32> to vector<2x4xf32>
    %228 = arith.mulf %226, %227 : vector<2x4xf32>
    %c0_39 = arith.constant 0 : index
    %229 = arith.index_cast %205 : i32 to index
    %c0_40 = arith.constant 0 : index
    %c0_41 = arith.constant 0 : index
    %230 = vector.load %arg4[%c0_39, %229, %c0_40, %c0_41] : memref<1x18x2x4xf32, #tpu.memory_space<vmem>>, vector<1x1x2x4xf32>
    %231 = vector.shape_cast %230 : vector<1x1x2x4xf32> to vector<2x4xf32>
    %232 = vector.shape_cast %228 : vector<2x4xf32> to vector<1x1x2x4xf32>
    tpu.vector_store %arg4[%c0_39, %229, %c0_40, %c0_41], %232 {strides = array<i32>} : memref<1x18x2x4xf32, #tpu.memory_space<vmem>>, vector<1x1x2x4xf32>,
    %c8_i32 = arith.constant 8 : i32
    %c9_i32 = arith.constant 9 : i32
    %233 = arith.select %0, %c8_i32, %c9_i32 : i32
    %234 = vector.broadcast %225 : vector<2x1xf32> to vector<2x4xf32>
    %235 = vector.broadcast %4 : vector<1x4xf32> to vector<2x4xf32>
    %236 = arith.mulf %234, %235 : vector<2x4xf32>
    %237 = vector.broadcast %2 : vector<1x4xf32> to vector<2x4xf32>
    %238 = arith.addf %237, %236 : vector<2x4xf32>
    %239 = arith.negf %238 : vector<2x4xf32>
    %240 = math.exp %239 : vector<2x4xf32>
    %cst_42 = arith.constant 1.000000e+00 : f32
    %241 = vector.broadcast %cst_42 : f32 to vector<2x4xf32>
    %242 = arith.addf %241, %240 : vector<2x4xf32>
    %243 = arith.divf %241, %242 : vector<2x4xf32>
    %244 = math.tanh %238 : vector<2x4xf32>
    %245 = vector.extract_strided_slice %243 {offsets = [0, 0], sizes = [2, 1], strides = [1, 1]} : vector<2x4xf32> to vector<2x1xf32>
    %246 = vector.extract_strided_slice %243 {offsets = [0, 1], sizes = [2, 1], strides = [1, 1]} : vector<2x4xf32> to vector<2x1xf32>
    %247 = vector.extract_strided_slice %244 {offsets = [0, 2], sizes = [2, 1], strides = [1, 1]} : vector<2x4xf32> to vector<2x1xf32>
    %248 = vector.extract_strided_slice %243 {offsets = [0, 3], sizes = [2, 1], strides = [1, 1]} : vector<2x4xf32> to vector<2x1xf32>
    %249 = arith.mulf %246, %223 : vector<2x1xf32>
    %250 = arith.mulf %245, %247 : vector<2x1xf32>
    %251 = arith.addf %249, %250 : vector<2x1xf32>
    %252 = math.tanh %251 : vector<2x1xf32>
    %253 = arith.mulf %248, %252 : vector<2x1xf32>
    %254 = vector.broadcast %253 : vector<2x1xf32> to vector<2x4xf32>
    %255 = vector.broadcast %6 : vector<1x4xf32> to vector<2x4xf32>
    %256 = arith.mulf %254, %255 : vector<2x4xf32>
    %c0_43 = arith.constant 0 : index
    %257 = arith.index_cast %233 : i32 to index
    %c0_44 = arith.constant 0 : index
    %c0_45 = arith.constant 0 : index
    %258 = vector.load %arg4[%c0_43, %257, %c0_44, %c0_45] : memref<1x18x2x4xf32, #tpu.memory_space<vmem>>, vector<1x1x2x4xf32>
    %259 = vector.shape_cast %258 : vector<1x1x2x4xf32> to vector<2x4xf32>
    %260 = vector.shape_cast %256 : vector<2x4xf32> to vector<1x1x2x4xf32>
    tpu.vector_store %arg4[%c0_43, %257, %c0_44, %c0_45], %260 {strides = array<i32>} : memref<1x18x2x4xf32, #tpu.memory_space<vmem>>, vector<1x1x2x4xf32>,
    %c9_i32_46 = arith.constant 9 : i32
    %c8_i32_47 = arith.constant 8 : i32
    %261 = arith.select %0, %c9_i32_46, %c8_i32_47 : i32
    %262 = vector.broadcast %253 : vector<2x1xf32> to vector<2x4xf32>
    %263 = vector.broadcast %4 : vector<1x4xf32> to vector<2x4xf32>
    %264 = arith.mulf %262, %263 : vector<2x4xf32>
    %265 = vector.broadcast %2 : vector<1x4xf32> to vector<2x4xf32>
    %266 = arith.addf %265, %264 : vector<2x4xf32>
    %267 = arith.negf %266 : vector<2x4xf32>
    %268 = math.exp %267 : vector<2x4xf32>
    %cst_48 = arith.constant 1.000000e+00 : f32
    %269 = vector.broadcast %cst_48 : f32 to vector<2x4xf32>
    %270 = arith.addf %269, %268 : vector<2x4xf32>
    %271 = arith.divf %269, %270 : vector<2x4xf32>
    %272 = math.tanh %266 : vector<2x4xf32>
    %273 = vector.extract_strided_slice %271 {offsets = [0, 0], sizes = [2, 1], strides = [1, 1]} : vector<2x4xf32> to vector<2x1xf32>
    %274 = vector.extract_strided_slice %271 {offsets = [0, 1], sizes = [2, 1], strides = [1, 1]} : vector<2x4xf32> to vector<2x1xf32>
    %275 = vector.extract_strided_slice %272 {offsets = [0, 2], sizes = [2, 1], strides = [1, 1]} : vector<2x4xf32> to vector<2x1xf32>
    %276 = vector.extract_strided_slice %271 {offsets = [0, 3], sizes = [2, 1], strides = [1, 1]} : vector<2x4xf32> to vector<2x1xf32>
    %277 = arith.mulf %274, %251 : vector<2x1xf32>
    %278 = arith.mulf %273, %275 : vector<2x1xf32>
    %279 = arith.addf %277, %278 : vector<2x1xf32>
    %280 = math.tanh %279 : vector<2x1xf32>
    %281 = arith.mulf %276, %280 : vector<2x1xf32>
    %282 = vector.broadcast %281 : vector<2x1xf32> to vector<2x4xf32>
    %283 = vector.broadcast %6 : vector<1x4xf32> to vector<2x4xf32>
    %284 = arith.mulf %282, %283 : vector<2x4xf32>
    %c0_49 = arith.constant 0 : index
    %285 = arith.index_cast %261 : i32 to index
    %c0_50 = arith.constant 0 : index
    %c0_51 = arith.constant 0 : index
    %286 = vector.load %arg4[%c0_49, %285, %c0_50, %c0_51] : memref<1x18x2x4xf32, #tpu.memory_space<vmem>>, vector<1x1x2x4xf32>
    %287 = vector.shape_cast %286 : vector<1x1x2x4xf32> to vector<2x4xf32>
    %288 = vector.shape_cast %284 : vector<2x4xf32> to vector<1x1x2x4xf32>
    tpu.vector_store %arg4[%c0_49, %285, %c0_50, %c0_51], %288 {strides = array<i32>} : memref<1x18x2x4xf32, #tpu.memory_space<vmem>>, vector<1x1x2x4xf32>,
    %c10_i32_52 = arith.constant 10 : i32
    %c7_i32_53 = arith.constant 7 : i32
    %289 = arith.select %0, %c10_i32_52, %c7_i32_53 : i32
    %290 = vector.broadcast %281 : vector<2x1xf32> to vector<2x4xf32>
    %291 = vector.broadcast %4 : vector<1x4xf32> to vector<2x4xf32>
    %292 = arith.mulf %290, %291 : vector<2x4xf32>
    %293 = vector.broadcast %2 : vector<1x4xf32> to vector<2x4xf32>
    %294 = arith.addf %293, %292 : vector<2x4xf32>
    %295 = arith.negf %294 : vector<2x4xf32>
    %296 = math.exp %295 : vector<2x4xf32>
    %cst_54 = arith.constant 1.000000e+00 : f32
    %297 = vector.broadcast %cst_54 : f32 to vector<2x4xf32>
    %298 = arith.addf %297, %296 : vector<2x4xf32>
    %299 = arith.divf %297, %298 : vector<2x4xf32>
    %300 = math.tanh %294 : vector<2x4xf32>
    %301 = vector.extract_strided_slice %299 {offsets = [0, 0], sizes = [2, 1], strides = [1, 1]} : vector<2x4xf32> to vector<2x1xf32>
    %302 = vector.extract_strided_slice %299 {offsets = [0, 1], sizes = [2, 1], strides = [1, 1]} : vector<2x4xf32> to vector<2x1xf32>
    %303 = vector.extract_strided_slice %300 {offsets = [0, 2], sizes = [2, 1], strides = [1, 1]} : vector<2x4xf32> to vector<2x1xf32>
    %304 = vector.extract_strided_slice %299 {offsets = [0, 3], sizes = [2, 1], strides = [1, 1]} : vector<2x4xf32> to vector<2x1xf32>
    %305 = arith.mulf %302, %279 : vector<2x1xf32>
    %306 = arith.mulf %301, %303 : vector<2x1xf32>
    %307 = arith.addf %305, %306 : vector<2x1xf32>
    %308 = math.tanh %307 : vector<2x1xf32>
    %309 = arith.mulf %304, %308 : vector<2x1xf32>
    %310 = vector.broadcast %309 : vector<2x1xf32> to vector<2x4xf32>
    %311 = vector.broadcast %6 : vector<1x4xf32> to vector<2x4xf32>
    %312 = arith.mulf %310, %311 : vector<2x4xf32>
    %c0_55 = arith.constant 0 : index
    %313 = arith.index_cast %289 : i32 to index
    %c0_56 = arith.constant 0 : index
    %c0_57 = arith.constant 0 : index
    %314 = vector.load %arg4[%c0_55, %313, %c0_56, %c0_57] : memref<1x18x2x4xf32, #tpu.memory_space<vmem>>, vector<1x1x2x4xf32>
    %315 = vector.shape_cast %314 : vector<1x1x2x4xf32> to vector<2x4xf32>
    %316 = vector.shape_cast %312 : vector<2x4xf32> to vector<1x1x2x4xf32>
    tpu.vector_store %arg4[%c0_55, %313, %c0_56, %c0_57], %316 {strides = array<i32>} : memref<1x18x2x4xf32, #tpu.memory_space<vmem>>, vector<1x1x2x4xf32>,
    %c11_i32_58 = arith.constant 11 : i32
    %c6_i32_59 = arith.constant 6 : i32
    %317 = arith.select %0, %c11_i32_58, %c6_i32_59 : i32
    %318 = vector.broadcast %309 : vector<2x1xf32> to vector<2x4xf32>
    %319 = vector.broadcast %4 : vector<1x4xf32> to vector<2x4xf32>
    %320 = arith.mulf %318, %319 : vector<2x4xf32>
    %321 = vector.broadcast %2 : vector<1x4xf32> to vector<2x4xf32>
    %322 = arith.addf %321, %320 : vector<2x4xf32>
    %323 = arith.negf %322 : vector<2x4xf32>
    %324 = math.exp %323 : vector<2x4xf32>
    %cst_60 = arith.constant 1.000000e+00 : f32
    %325 = vector.broadcast %cst_60 : f32 to vector<2x4xf32>
    %326 = arith.addf %325, %324 : vector<2x4xf32>
    %327 = arith.divf %325, %326 : vector<2x4xf32>
    %328 = math.tanh %322 : vector<2x4xf32>
    %329 = vector.extract_strided_slice %327 {offsets = [0, 0], sizes = [2, 1], strides = [1, 1]} : vector<2x4xf32> to vector<2x1xf32>
    %330 = vector.extract_strided_slice %327 {offsets = [0, 1], sizes = [2, 1], strides = [1, 1]} : vector<2x4xf32> to vector<2x1xf32>
    %331 = vector.extract_strided_slice %328 {offsets = [0, 2], sizes = [2, 1], strides = [1, 1]} : vector<2x4xf32> to vector<2x1xf32>
    %332 = vector.extract_strided_slice %327 {offsets = [0, 3], sizes = [2, 1], strides = [1, 1]} : vector<2x4xf32> to vector<2x1xf32>
    %333 = arith.mulf %330, %307 : vector<2x1xf32>
    %334 = arith.mulf %329, %331 : vector<2x1xf32>
    %335 = arith.addf %333, %334 : vector<2x1xf32>
    %336 = math.tanh %335 : vector<2x1xf32>
    %337 = arith.mulf %332, %336 : vector<2x1xf32>
    %338 = vector.broadcast %337 : vector<2x1xf32> to vector<2x4xf32>
    %339 = vector.broadcast %6 : vector<1x4xf32> to vector<2x4xf32>
    %340 = arith.mulf %338, %339 : vector<2x4xf32>
    %c0_61 = arith.constant 0 : index
    %341 = arith.index_cast %317 : i32 to index
    %c0_62 = arith.constant 0 : index
    %c0_63 = arith.constant 0 : index
    %342 = vector.load %arg4[%c0_61, %341, %c0_62, %c0_63] : memref<1x18x2x4xf32, #tpu.memory_space<vmem>>, vector<1x1x2x4xf32>
    %343 = vector.shape_cast %342 : vector<1x1x2x4xf32> to vector<2x4xf32>
    %344 = vector.shape_cast %340 : vector<2x4xf32> to vector<1x1x2x4xf32>
    tpu.vector_store %arg4[%c0_61, %341, %c0_62, %c0_63], %344 {strides = array<i32>} : memref<1x18x2x4xf32, #tpu.memory_space<vmem>>, vector<1x1x2x4xf32>,
    %c12_i32_64 = arith.constant 12 : i32
    %c5_i32_65 = arith.constant 5 : i32
    %345 = arith.select %0, %c12_i32_64, %c5_i32_65 : i32
    %346 = vector.broadcast %337 : vector<2x1xf32> to vector<2x4xf32>
    %347 = vector.broadcast %4 : vector<1x4xf32> to vector<2x4xf32>
    %348 = arith.mulf %346, %347 : vector<2x4xf32>
    %349 = vector.broadcast %2 : vector<1x4xf32> to vector<2x4xf32>
    %350 = arith.addf %349, %348 : vector<2x4xf32>
    %351 = arith.negf %350 : vector<2x4xf32>
    %352 = math.exp %351 : vector<2x4xf32>
    %cst_66 = arith.constant 1.000000e+00 : f32
    %353 = vector.broadcast %cst_66 : f32 to vector<2x4xf32>
    %354 = arith.addf %353, %352 : vector<2x4xf32>
    %355 = arith.divf %353, %354 : vector<2x4xf32>
    %356 = math.tanh %350 : vector<2x4xf32>
    %357 = vector.extract_strided_slice %355 {offsets = [0, 0], sizes = [2, 1], strides = [1, 1]} : vector<2x4xf32> to vector<2x1xf32>
    %358 = vector.extract_strided_slice %355 {offsets = [0, 1], sizes = [2, 1], strides = [1, 1]} : vector<2x4xf32> to vector<2x1xf32>
    %359 = vector.extract_strided_slice %356 {offsets = [0, 2], sizes = [2, 1], strides = [1, 1]} : vector<2x4xf32> to vector<2x1xf32>
    %360 = vector.extract_strided_slice %355 {offsets = [0, 3], sizes = [2, 1], strides = [1, 1]} : vector<2x4xf32> to vector<2x1xf32>
    %361 = arith.mulf %358, %335 : vector<2x1xf32>
    %362 = arith.mulf %357, %359 : vector<2x1xf32>
    %363 = arith.addf %361, %362 : vector<2x1xf32>
    %364 = math.tanh %363 : vector<2x1xf32>
    %365 = arith.mulf %360, %364 : vector<2x1xf32>
    %366 = vector.broadcast %365 : vector<2x1xf32> to vector<2x4xf32>
    %367 = vector.broadcast %6 : vector<1x4xf32> to vector<2x4xf32>
    %368 = arith.mulf %366, %367 : vector<2x4xf32>
    %c0_67 = arith.constant 0 : index
    %369 = arith.index_cast %345 : i32 to index
    %c0_68 = arith.constant 0 : index
    %c0_69 = arith.constant 0 : index
    %370 = vector.load %arg4[%c0_67, %369, %c0_68, %c0_69] : memref<1x18x2x4xf32, #tpu.memory_space<vmem>>, vector<1x1x2x4xf32>
    %371 = vector.shape_cast %370 : vector<1x1x2x4xf32> to vector<2x4xf32>
    %372 = vector.shape_cast %368 : vector<2x4xf32> to vector<1x1x2x4xf32>
    tpu.vector_store %arg4[%c0_67, %369, %c0_68, %c0_69], %372 {strides = array<i32>} : memref<1x18x2x4xf32, #tpu.memory_space<vmem>>, vector<1x1x2x4xf32>,
    %c13_i32_70 = arith.constant 13 : i32
    %c4_i32_71 = arith.constant 4 : i32
    %373 = arith.select %0, %c13_i32_70, %c4_i32_71 : i32
    %374 = vector.broadcast %365 : vector<2x1xf32> to vector<2x4xf32>
    %375 = vector.broadcast %4 : vector<1x4xf32> to vector<2x4xf32>
    %376 = arith.mulf %374, %375 : vector<2x4xf32>
    %377 = vector.broadcast %2 : vector<1x4xf32> to vector<2x4xf32>
    %378 = arith.addf %377, %376 : vector<2x4xf32>
    %379 = arith.negf %378 : vector<2x4xf32>
    %380 = math.exp %379 : vector<2x4xf32>
    %cst_72 = arith.constant 1.000000e+00 : f32
    %381 = vector.broadcast %cst_72 : f32 to vector<2x4xf32>
    %382 = arith.addf %381, %380 : vector<2x4xf32>
    %383 = arith.divf %381, %382 : vector<2x4xf32>
    %384 = math.tanh %378 : vector<2x4xf32>
    %385 = vector.extract_strided_slice %383 {offsets = [0, 0], sizes = [2, 1], strides = [1, 1]} : vector<2x4xf32> to vector<2x1xf32>
    %386 = vector.extract_strided_slice %383 {offsets = [0, 1], sizes = [2, 1], strides = [1, 1]} : vector<2x4xf32> to vector<2x1xf32>
    %387 = vector.extract_strided_slice %384 {offsets = [0, 2], sizes = [2, 1], strides = [1, 1]} : vector<2x4xf32> to vector<2x1xf32>
    %388 = vector.extract_strided_slice %383 {offsets = [0, 3], sizes = [2, 1], strides = [1, 1]} : vector<2x4xf32> to vector<2x1xf32>
    %389 = arith.mulf %386, %363 : vector<2x1xf32>
    %390 = arith.mulf %385, %387 : vector<2x1xf32>
    %391 = arith.addf %389, %390 : vector<2x1xf32>
    %392 = math.tanh %391 : vector<2x1xf32>
    %393 = arith.mulf %388, %392 : vector<2x1xf32>
    %394 = vector.broadcast %393 : vector<2x1xf32> to vector<2x4xf32>
    %395 = vector.broadcast %6 : vector<1x4xf32> to vector<2x4xf32>
    %396 = arith.mulf %394, %395 : vector<2x4xf32>
    %c0_73 = arith.constant 0 : index
    %397 = arith.index_cast %373 : i32 to index
    %c0_74 = arith.constant 0 : index
    %c0_75 = arith.constant 0 : index
    %398 = vector.load %arg4[%c0_73, %397, %c0_74, %c0_75] : memref<1x18x2x4xf32, #tpu.memory_space<vmem>>, vector<1x1x2x4xf32>
    %399 = vector.shape_cast %398 : vector<1x1x2x4xf32> to vector<2x4xf32>
    %400 = vector.shape_cast %396 : vector<2x4xf32> to vector<1x1x2x4xf32>
    tpu.vector_store %arg4[%c0_73, %397, %c0_74, %c0_75], %400 {strides = array<i32>} : memref<1x18x2x4xf32, #tpu.memory_space<vmem>>, vector<1x1x2x4xf32>,
    %c14_i32_76 = arith.constant 14 : i32
    %c3_i32_77 = arith.constant 3 : i32
    %401 = arith.select %0, %c14_i32_76, %c3_i32_77 : i32
    %402 = vector.broadcast %393 : vector<2x1xf32> to vector<2x4xf32>
    %403 = vector.broadcast %4 : vector<1x4xf32> to vector<2x4xf32>
    %404 = arith.mulf %402, %403 : vector<2x4xf32>
    %405 = vector.broadcast %2 : vector<1x4xf32> to vector<2x4xf32>
    %406 = arith.addf %405, %404 : vector<2x4xf32>
    %407 = arith.negf %406 : vector<2x4xf32>
    %408 = math.exp %407 : vector<2x4xf32>
    %cst_78 = arith.constant 1.000000e+00 : f32
    %409 = vector.broadcast %cst_78 : f32 to vector<2x4xf32>
    %410 = arith.addf %409, %408 : vector<2x4xf32>
    %411 = arith.divf %409, %410 : vector<2x4xf32>
    %412 = math.tanh %406 : vector<2x4xf32>
    %413 = vector.extract_strided_slice %411 {offsets = [0, 0], sizes = [2, 1], strides = [1, 1]} : vector<2x4xf32> to vector<2x1xf32>
    %414 = vector.extract_strided_slice %411 {offsets = [0, 1], sizes = [2, 1], strides = [1, 1]} : vector<2x4xf32> to vector<2x1xf32>
    %415 = vector.extract_strided_slice %412 {offsets = [0, 2], sizes = [2, 1], strides = [1, 1]} : vector<2x4xf32> to vector<2x1xf32>
    %416 = vector.extract_strided_slice %411 {offsets = [0, 3], sizes = [2, 1], strides = [1, 1]} : vector<2x4xf32> to vector<2x1xf32>
    %417 = arith.mulf %414, %391 : vector<2x1xf32>
    %418 = arith.mulf %413, %415 : vector<2x1xf32>
    %419 = arith.addf %417, %418 : vector<2x1xf32>
    %420 = math.tanh %419 : vector<2x1xf32>
    %421 = arith.mulf %416, %420 : vector<2x1xf32>
    %422 = vector.broadcast %421 : vector<2x1xf32> to vector<2x4xf32>
    %423 = vector.broadcast %6 : vector<1x4xf32> to vector<2x4xf32>
    %424 = arith.mulf %422, %423 : vector<2x4xf32>
    %c0_79 = arith.constant 0 : index
    %425 = arith.index_cast %401 : i32 to index
    %c0_80 = arith.constant 0 : index
    %c0_81 = arith.constant 0 : index
    %426 = vector.load %arg4[%c0_79, %425, %c0_80, %c0_81] : memref<1x18x2x4xf32, #tpu.memory_space<vmem>>, vector<1x1x2x4xf32>
    %427 = vector.shape_cast %426 : vector<1x1x2x4xf32> to vector<2x4xf32>
    %428 = vector.shape_cast %424 : vector<2x4xf32> to vector<1x1x2x4xf32>
    tpu.vector_store %arg4[%c0_79, %425, %c0_80, %c0_81], %428 {strides = array<i32>} : memref<1x18x2x4xf32, #tpu.memory_space<vmem>>, vector<1x1x2x4xf32>,
    %c15_i32_82 = arith.constant 15 : i32
    %c2_i32_83 = arith.constant 2 : i32
    %429 = arith.select %0, %c15_i32_82, %c2_i32_83 : i32
    %430 = vector.broadcast %421 : vector<2x1xf32> to vector<2x4xf32>
    %431 = vector.broadcast %4 : vector<1x4xf32> to vector<2x4xf32>
    %432 = arith.mulf %430, %431 : vector<2x4xf32>
    %433 = vector.broadcast %2 : vector<1x4xf32> to vector<2x4xf32>
    %434 = arith.addf %433, %432 : vector<2x4xf32>
    %435 = arith.negf %434 : vector<2x4xf32>
    %436 = math.exp %435 : vector<2x4xf32>
    %cst_84 = arith.constant 1.000000e+00 : f32
    %437 = vector.broadcast %cst_84 : f32 to vector<2x4xf32>
    %438 = arith.addf %437, %436 : vector<2x4xf32>
    %439 = arith.divf %437, %438 : vector<2x4xf32>
    %440 = math.tanh %434 : vector<2x4xf32>
    %441 = vector.extract_strided_slice %439 {offsets = [0, 0], sizes = [2, 1], strides = [1, 1]} : vector<2x4xf32> to vector<2x1xf32>
    %442 = vector.extract_strided_slice %439 {offsets = [0, 1], sizes = [2, 1], strides = [1, 1]} : vector<2x4xf32> to vector<2x1xf32>
    %443 = vector.extract_strided_slice %440 {offsets = [0, 2], sizes = [2, 1], strides = [1, 1]} : vector<2x4xf32> to vector<2x1xf32>
    %444 = vector.extract_strided_slice %439 {offsets = [0, 3], sizes = [2, 1], strides = [1, 1]} : vector<2x4xf32> to vector<2x1xf32>
    %445 = arith.mulf %442, %419 : vector<2x1xf32>
    %446 = arith.mulf %441, %443 : vector<2x1xf32>
    %447 = arith.addf %445, %446 : vector<2x1xf32>
    %448 = math.tanh %447 : vector<2x1xf32>
    %449 = arith.mulf %444, %448 : vector<2x1xf32>
    %450 = vector.broadcast %449 : vector<2x1xf32> to vector<2x4xf32>
    %451 = vector.broadcast %6 : vector<1x4xf32> to vector<2x4xf32>
    %452 = arith.mulf %450, %451 : vector<2x4xf32>
    %c0_85 = arith.constant 0 : index
    %453 = arith.index_cast %429 : i32 to index
    %c0_86 = arith.constant 0 : index
    %c0_87 = arith.constant 0 : index
    %454 = vector.load %arg4[%c0_85, %453, %c0_86, %c0_87] : memref<1x18x2x4xf32, #tpu.memory_space<vmem>>, vector<1x1x2x4xf32>
    %455 = vector.shape_cast %454 : vector<1x1x2x4xf32> to vector<2x4xf32>
    %456 = vector.shape_cast %452 : vector<2x4xf32> to vector<1x1x2x4xf32>
    tpu.vector_store %arg4[%c0_85, %453, %c0_86, %c0_87], %456 {strides = array<i32>} : memref<1x18x2x4xf32, #tpu.memory_space<vmem>>, vector<1x1x2x4xf32>,
    %c16_i32_88 = arith.constant 16 : i32
    %c1_i32_89 = arith.constant 1 : i32
    %457 = arith.select %0, %c16_i32_88, %c1_i32_89 : i32
    %458 = vector.broadcast %449 : vector<2x1xf32> to vector<2x4xf32>
    %459 = vector.broadcast %4 : vector<1x4xf32> to vector<2x4xf32>
    %460 = arith.mulf %458, %459 : vector<2x4xf32>
    %461 = vector.broadcast %2 : vector<1x4xf32> to vector<2x4xf32>
    %462 = arith.addf %461, %460 : vector<2x4xf32>
    %463 = arith.negf %462 : vector<2x4xf32>
    %464 = math.exp %463 : vector<2x4xf32>
    %cst_90 = arith.constant 1.000000e+00 : f32
    %465 = vector.broadcast %cst_90 : f32 to vector<2x4xf32>
    %466 = arith.addf %465, %464 : vector<2x4xf32>
    %467 = arith.divf %465, %466 : vector<2x4xf32>
    %468 = math.tanh %462 : vector<2x4xf32>
    %469 = vector.extract_strided_slice %467 {offsets = [0, 0], sizes = [2, 1], strides = [1, 1]} : vector<2x4xf32> to vector<2x1xf32>
    %470 = vector.extract_strided_slice %467 {offsets = [0, 1], sizes = [2, 1], strides = [1, 1]} : vector<2x4xf32> to vector<2x1xf32>
    %471 = vector.extract_strided_slice %468 {offsets = [0, 2], sizes = [2, 1], strides = [1, 1]} : vector<2x4xf32> to vector<2x1xf32>
    %472 = vector.extract_strided_slice %467 {offsets = [0, 3], sizes = [2, 1], strides = [1, 1]} : vector<2x4xf32> to vector<2x1xf32>
    %473 = arith.mulf %470, %447 : vector<2x1xf32>
    %474 = arith.mulf %469, %471 : vector<2x1xf32>
    %475 = arith.addf %473, %474 : vector<2x1xf32>
    %476 = math.tanh %475 : vector<2x1xf32>
    %477 = arith.mulf %472, %476 : vector<2x1xf32>
    %478 = vector.broadcast %477 : vector<2x1xf32> to vector<2x4xf32>
    %479 = vector.broadcast %6 : vector<1x4xf32> to vector<2x4xf32>
    %480 = arith.mulf %478, %479 : vector<2x4xf32>
    %c0_91 = arith.constant 0 : index
    %481 = arith.index_cast %457 : i32 to index
    %c0_92 = arith.constant 0 : index
    %c0_93 = arith.constant 0 : index
    %482 = vector.load %arg4[%c0_91, %481, %c0_92, %c0_93] : memref<1x18x2x4xf32, #tpu.memory_space<vmem>>, vector<1x1x2x4xf32>
    %483 = vector.shape_cast %482 : vector<1x1x2x4xf32> to vector<2x4xf32>
    %484 = vector.shape_cast %480 : vector<2x4xf32> to vector<1x1x2x4xf32>
    tpu.vector_store %arg4[%c0_91, %481, %c0_92, %c0_93], %484 {strides = array<i32>} : memref<1x18x2x4xf32, #tpu.memory_space<vmem>>, vector<1x1x2x4xf32>,
    %c17_i32_94 = arith.constant 17 : i32
    %c0_i32_95 = arith.constant 0 : i32
    %485 = arith.select %0, %c17_i32_94, %c0_i32_95 : i32
    %486 = vector.broadcast %477 : vector<2x1xf32> to vector<2x4xf32>
    %487 = vector.broadcast %4 : vector<1x4xf32> to vector<2x4xf32>
    %488 = arith.mulf %486, %487 : vector<2x4xf32>
    %489 = vector.broadcast %2 : vector<1x4xf32> to vector<2x4xf32>
    %490 = arith.addf %489, %488 : vector<2x4xf32>
    %491 = arith.negf %490 : vector<2x4xf32>
    %492 = math.exp %491 : vector<2x4xf32>
    %cst_96 = arith.constant 1.000000e+00 : f32
    %493 = vector.broadcast %cst_96 : f32 to vector<2x4xf32>
    %494 = arith.addf %493, %492 : vector<2x4xf32>
    %495 = arith.divf %493, %494 : vector<2x4xf32>
    %496 = math.tanh %490 : vector<2x4xf32>
    %497 = vector.extract_strided_slice %495 {offsets = [0, 0], sizes = [2, 1], strides = [1, 1]} : vector<2x4xf32> to vector<2x1xf32>
    %498 = vector.extract_strided_slice %495 {offsets = [0, 1], sizes = [2, 1], strides = [1, 1]} : vector<2x4xf32> to vector<2x1xf32>
    %499 = vector.extract_strided_slice %496 {offsets = [0, 2], sizes = [2, 1], strides = [1, 1]} : vector<2x4xf32> to vector<2x1xf32>
    %500 = vector.extract_strided_slice %495 {offsets = [0, 3], sizes = [2, 1], strides = [1, 1]} : vector<2x4xf32> to vector<2x1xf32>
    %501 = arith.mulf %498, %475 : vector<2x1xf32>
    %502 = arith.mulf %497, %499 : vector<2x1xf32>
    %503 = arith.addf %501, %502 : vector<2x1xf32>
    %504 = math.tanh %503 : vector<2x1xf32>
    %505 = arith.mulf %500, %504 : vector<2x1xf32>
    %506 = vector.broadcast %505 : vector<2x1xf32> to vector<2x4xf32>
    %507 = vector.broadcast %6 : vector<1x4xf32> to vector<2x4xf32>
    %508 = arith.mulf %506, %507 : vector<2x4xf32>
    %c0_97 = arith.constant 0 : index
    %509 = arith.index_cast %485 : i32 to index
    %c0_98 = arith.constant 0 : index
    %c0_99 = arith.constant 0 : index
    %510 = vector.load %arg4[%c0_97, %509, %c0_98, %c0_99] : memref<1x18x2x4xf32, #tpu.memory_space<vmem>>, vector<1x1x2x4xf32>
    %511 = vector.shape_cast %510 : vector<1x1x2x4xf32> to vector<2x4xf32>
    %512 = vector.shape_cast %508 : vector<2x4xf32> to vector<1x1x2x4xf32>
    tpu.vector_store %arg4[%c0_97, %509, %c0_98, %c0_99], %512 {strides = array<i32>} : memref<1x18x2x4xf32, #tpu.memory_space<vmem>>, vector<1x1x2x4xf32>,
    return
  }
  func.func @transform_0(%arg0: i32) -> (i32, i32, i32) {
    %c0_i32 = arith.constant 0 : i32
    %c0_i32_0 = arith.constant 0 : i32
    %c0_i32_1 = arith.constant 0 : i32
    return %arg0, %c0_i32, %c0_i32_0 : i32, i32, i32
  }
  func.func @transform_1(%arg0: i32) -> (i32, i32, i32) {
    %c0_i32 = arith.constant 0 : i32
    %c0_i32_0 = arith.constant 0 : i32
    %c0_i32_1 = arith.constant 0 : i32
    return %arg0, %c0_i32, %c0_i32_0 : i32, i32, i32
  }
  func.func @transform_2(%arg0: i32) -> (i32, i32, i32) {
    %c0_i32 = arith.constant 0 : i32
    %c0_i32_0 = arith.constant 0 : i32
    %c0_i32_1 = arith.constant 0 : i32
    return %arg0, %c0_i32, %c0_i32_0 : i32, i32, i32
  }
  func.func @transform_3(%arg0: i32) -> (i32, i32, i32, i32) {
    %c0_i32 = arith.constant 0 : i32
    %c0_i32_0 = arith.constant 0 : i32
    %c0_i32_1 = arith.constant 0 : i32
    %c0_i32_2 = arith.constant 0 : i32
    return %arg0, %c0_i32, %c0_i32_0, %c0_i32_1 : i32, i32, i32, i32
  }
}

</mosaic_0001>

<llo_original>
// kernel: tpu_custom_call.1
$region0: #{tpu_custom_call.1}
  #allocation0 [shape = 'u32[]', space=smem, size = 0x4, offset = 0x4, fixed_abs, tag = 'smem constant byte address 0x4 - core index']
  #allocation1 [shape = 'u32[144,128]{1,0:T(1,128)}', space=vmem, size = 0x12000, scoped, tag = 'internal scratch']
  %s0 = inlined_call_operand.hbm [shape: f32[2,1,4], index: 0, kind: input, shape index: {}]
  %s1 = inlined_call_operand.vmem [shape: f32[2,1,4], index: 1, kind: input, shape index: {}]
  %s2 = inlined_call_operand.vmem [shape: f32[2,1,4], index: 2, kind: input, shape index: {}]
  %s3 = inlined_call_operand.vmem [shape: f32[2,18,2,4], index: 3, kind: output, shape index: {}]
  %s4 = sld [smem:[#allocation0]]
  $region49: #{tpu_custom_call.1} parent=0
    _
  %s6 = ssub.s32 1, %s4
  %s7 = scalar_select 0, %s6, %s4
  $region1: #{tpu_custom_call.1} parent=0
    #allocation2 [shape = 'u8[1024]{0}', space=vmem, size = 0x400, scoped, tag = 'input window, operand 0']
    #allocation3 [shape = 's32[2]{0}', space=sflag, size = 0x8, scoped, tag = 'scoped memory for tpu_custom_call.1']
    %8 = vsyncpa [#allocation3], 0
    %s9 = scalar_lea.sflag [#allocation3], 1
    %10 = vsyncpa %s9, 0
    loop: start=0, step=1, limit=4
    $region2: #{tpu_custom_call.1} parent=1 // loop_pre_header
      _
    $region3: #{tpu_custom_call.1} parent=1 // loop_header
      %s12 = sphi 0, %s16
      %p13 = scmp.ge.s32.totalorder %s12, 4
      %s22 = sphi 0, %s24
      %s25 = sphi 0, %s22
      %s26 = sphi 0, %s25
      %s42 = sphi 0, %s26
      %s48 = sphi 0, %s50
      %s51 = sphi 0, %s48
      %s52 = sphi 0, %s51
      %s68 = sphi 0, %s52
      %s74 = sphi 0, %s76
      %s77 = sphi 0, %s74
      %s78 = sphi 0, %s77
      %s94 = sphi 0, %s78
      %s100 = sphi 0, %s102
      %s103 = sphi 0, %s100
      %s104 = sphi 0, %s103
      %s120 = sphi 0, %s104
    $region4: #{tpu_custom_call.1} parent=1 // loop_header_branch
      %15 = sbr.rel (%p13) target = $region8
    $region5: #{tpu_custom_call.1} parent=1 // loop_body
      %s17 = ssub.s32 %s12, 1
      %s18 = ssub.s32 %s12, 2
      %s19 = sadd.s32 %s12, 1
      %s20 = ssub.s32 %s12, %s19
      %p21 = scmp.eq.s32.totalorder %s20, 0
      %s23 = sadd.s32 %s22, 1
      %s24 = scalar_select %p21, %s22, %s23
      %p27 = pneg %p21
      %p28 = scmp.eq.s32.totalorder %s12, 1
      %p29 = por %p27, %p28
      %p30 = scmp.ne.s32.totalorder %s22, %s25
      %p31 = scmp.eq.s32.totalorder %s12, 0
      %p32 = por %p30, %p31
      %p33 = scmp.ne.s32.totalorder %s22, %s25
      %p34 = scmp.eq.s32.totalorder %s17, 1
      %p35 = por %p33, %p34
      %p36 = scmp.ne.s32.totalorder %s25, %s26
      %p37 = scmp.eq.s32.totalorder %s17, 0
      %p38 = por %p36, %p37
      %p39 = scmp.ne.s32.totalorder %s25, %s26
      %p40 = scmp.eq.s32.totalorder %s18, 1
      %p41 = por %p39, %p40
      %p43 = scmp.ne.s32.totalorder %s26, %s42
      %p44 = scmp.eq.s32.totalorder %s18, 0
      %p45 = por %p43, %p44
      %s46 = ssub.s32 %s12, %s19
      %p47 = scmp.eq.s32.totalorder %s46, 0
      %s49 = sadd.s32 %s48, 1
      %s50 = scalar_select %p47, %s48, %s49
      %p53 = pneg %p47
      %p54 = scmp.eq.s32.totalorder %s12, 1
      %p55 = por %p53, %p54
      %p56 = scmp.ne.s32.totalorder %s48, %s51
      %p57 = scmp.eq.s32.totalorder %s12, 0
      %p58 = por %p56, %p57
      %p59 = scmp.ne.s32.totalorder %s48, %s51
      %p60 = scmp.eq.s32.totalorder %s17, 1
      %p61 = por %p59, %p60
      %p62 = scmp.ne.s32.totalorder %s51, %s52
      %p63 = scmp.eq.s32.totalorder %s17, 0
      %p64 = por %p62, %p63
      %p65 = scmp.ne.s32.totalorder %s51, %s52
      %p66 = scmp.eq.s32.totalorder %s18, 1
      %p67 = por %p65, %p66
      %p69 = scmp.ne.s32.totalorder %s52, %s68
      %p70 = scmp.eq.s32.totalorder %s18, 0
      %p71 = por %p69, %p70
      %s72 = ssub.s32 %s12, %s19
      %p73 = scmp.eq.s32.totalorder %s72, 0
      %s75 = sadd.s32 %s74, 1
      %s76 = scalar_select %p73, %s74, %s75
      %p79 = pneg %p73
      %p80 = scmp.eq.s32.totalorder %s12, 1
      %p81 = por %p79, %p80
      %p82 = scmp.ne.s32.totalorder %s74, %s77
      %p83 = scmp.eq.s32.totalorder %s12, 0
      %p84 = por %p82, %p83
      %p85 = scmp.ne.s32.totalorder %s74, %s77
      %p86 = scmp.eq.s32.totalorder %s17, 1
      %p87 = por %p85, %p86
      %p88 = scmp.ne.s32.totalorder %s77, %s78
      %p89 = scmp.eq.s32.totalorder %s17, 0
      %p90 = por %p88, %p89
      %p91 = scmp.ne.s32.totalorder %s77, %s78
      %p92 = scmp.eq.s32.totalorder %s18, 1
      %p93 = por %p91, %p92
      %p95 = scmp.ne.s32.totalorder %s78, %s94
      %p96 = scmp.eq.s32.totalorder %s18, 0
      %p97 = por %p95, %p96
      %s98 = ssub.s32 %s12, %s19
      %p99 = scmp.eq.s32.totalorder %s98, 0
      %s101 = sadd.s32 %s100, 1
      %s102 = scalar_select %p99, %s100, %s101
      %p105 = pneg %p99
      %p106 = scmp.eq.s32.totalorder %s12, 1
      %p107 = por %p105, %p106
      %p108 = scmp.ne.s32.totalorder %s100, %s103
      %p109 = scmp.eq.s32.totalorder %s12, 0
      %p110 = por %p108, %p109
      %p111 = scmp.ne.s32.totalorder %s100, %s103
      %p112 = scmp.eq.s32.totalorder %s17, 1
      %p113 = por %p111, %p112
      %p114 = scmp.ne.s32.totalorder %s103, %s104
      %p115 = scmp.eq.s32.totalorder %s17, 0
      %p116 = por %p114, %p115
      %p117 = scmp.ne.s32.totalorder %s103, %s104
      %p118 = scmp.eq.s32.totalorder %s18, 1
      %p119 = por %p117, %p118
      %p121 = scmp.ne.s32.totalorder %s104, %s120
      %p122 = scmp.eq.s32.totalorder %s18, 0
      %p123 = por %p121, %p122
      %p124 = scmp.le.s32.totalorder 1, %s12
      %p125 = scmp.lt.s32.totalorder %s12, 3
      %p126 = pnand %p124, %p125
      %p127 = pneg %p126
      // Predicated region
      $region9: #{tpu_custom_call.1} parent=5 // pred_check
        _
      $region10: #{tpu_custom_call.1} parent=5 // pred_check_branch
        %129 = sbr.rel (%p126) target = $region12
      $region11: #{tpu_custom_call.1} parent=5 // pred_region
        %s130 = ssub.s32 %s12, 1
      $region12: #{tpu_custom_call.1} parent=5 // pred_fallthru
        _
      %p131 = scmp.lt.s32.totalorder %s12, 2
      // Predicated region
      $region13: #{tpu_custom_call.1} parent=5 // pred_check
        %p132 = pneg %p131
      $region14: #{tpu_custom_call.1} parent=5 // pred_check_branch
        %134 = sbr.rel (%p132) target = $region16
      $region15: #{tpu_custom_call.1} parent=5 // pred_region
        // Predicated region
        $region17: #{tpu_custom_call.1} parent=15 // pred_check
          %p135 = pneg %p32
        $region18: #{tpu_custom_call.1} parent=15 // pred_check_branch
          %137 = sbr.rel (%p135) target = $region20
        $region19: #{tpu_custom_call.1} parent=15 // pred_region
          %s138 = sand.u32 %s22, 1
          %s139 = scalar_lea.sflag [#allocation3], %s138
          %s140 = sand.u32 %s22, 1
          %s141 = scalar_lea.vmem [#allocation2], %s140
          %s143 = ssub.s32 16, 16
          %144 = vsyncadd %s139, %s143
          %s145 = smul.addr %s12, 16
          %s146 = scalar_lea.hbm %s0, %s145
          %s148 = sshll.u32 %s141, 4
          %s149 = int_to_ptr.vmem [resolvable:$true] %s148
          %151 = dma.hbm_to_vmem [thread:$0]  %s146, 16, %s149, %s139
        $region20: #{tpu_custom_call.1} parent=15 // pred_fallthru
          _
        // Predicated region
        $region21: #{tpu_custom_call.1} parent=15 // pred_check
          %p152 = pneg %p58
        $region22: #{tpu_custom_call.1} parent=15 // pred_check_branch
          %154 = sbr.rel (%p152) target = $region24
        $region23: #{tpu_custom_call.1} parent=15 // pred_region
          %p155 = scmp.lt.s32.totalorder %s12, 1
          %s156 = scalar_select %p155, %s12, 1
          %s157 = scalar_lea.vmem %s1, %s156
        $region24: #{tpu_custom_call.1} parent=15 // pred_fallthru
          _
        // Predicated region
        $region25: #{tpu_custom_call.1} parent=15 // pred_check
          %p158 = pneg %p84
        $region26: #{tpu_custom_call.1} parent=15 // pred_check_branch
          %160 = sbr.rel (%p158) target = $region28
        $region27: #{tpu_custom_call.1} parent=15 // pred_region
          %p161 = scmp.lt.s32.totalorder %s12, 1
          %s162 = scalar_select %p161, %s12, 1
          %s163 = scalar_lea.vmem %s2, %s162
        $region28: #{tpu_custom_call.1} parent=15 // pred_fallthru
          _
      $region16: #{tpu_custom_call.1} parent=5 // pred_fallthru
        _
      %p164 = scmp.le.s32.totalorder 1, %s12
      %p165 = scmp.lt.s32.totalorder %s12, 3
      %p166 = pnand %p164, %p165
      %p167 = pneg %p166
      // Predicated region
      $region29: #{tpu_custom_call.1} parent=5 // pred_check
        _
      $region30: #{tpu_custom_call.1} parent=5 // pred_check_branch
        %169 = sbr.rel (%p166) target = $region32
      $region31: #{tpu_custom_call.1} parent=5 // pred_region
        %s170 = ssub.s32 %s12, 1
        %s171 = sand.u32 %s25, 1
        %s172 = scalar_lea.sflag [#allocation3], %s171
        %s173 = sand.u32 %s25, 1
        %s174 = scalar_lea.vmem [#allocation2], %s173
        // Predicated region
        $region33: #{tpu_custom_call.1} parent=31 // pred_check
          %p175 = pneg %p38
        $region34: #{tpu_custom_call.1} parent=31 // pred_check_branch
          %177 = sbr.rel (%p175) target = $region36
        $region35: #{tpu_custom_call.1} parent=31 // pred_region
          %178 = dma.done %s172, 16
        $region36: #{tpu_custom_call.1} parent=31 // pred_fallthru
          _
        %s179 = sand.u32 %s25, 1
        %s180 = scalar_lea.sflag [#allocation3], %s179
        %s181 = sand.u32 %s25, 1
        %s182 = scalar_lea.vmem [#allocation2], %s181
        %p183 = pneg %p38
        %p184 = pneg %p35
        %p185 = scmp.lt.s32.totalorder %s17, 1
        %s186 = scalar_select %p185, %s17, 1
        %s187 = scalar_lea.vmem %s1, %s186
        %p188 = pneg %p64
        %p189 = pneg %p61
        %p190 = scmp.lt.s32.totalorder %s17, 1
        %s191 = scalar_select %p190, %s17, 1
        %s192 = scalar_lea.vmem %s2, %s191
        %p193 = pneg %p90
        %p194 = pneg %p87
        %p195 = pneg %p116
        %p196 = pneg %p113
        %p197 = scmp.lt.s32.totalorder %s17, 1
        %s198 = scalar_select %p197, %s17, 1
        %s199 = smul.addr %s198, 18
        %s200 = smul.addr %s199, 2
        %s201 = scalar_lea.vmem %s3, %s200
        %p202 = scmp.lt.s32.totalorder %s17, 1
        %s203 = scalar_select %p202, %s17, 1
        %s204 = scalar_lea.vmem %s1, %s203
        %p205 = scmp.lt.s32.totalorder %s17, 1
        %s206 = scalar_select %p205, %s17, 1
        %s207 = scalar_lea.vmem %s2, %s206
        %p208 = scmp.lt.s32.totalorder %s17, 1
        %s209 = scalar_select %p208, %s17, 1
        %s210 = smul.addr %s209, 18
        %s211 = smul.addr %s210, 2
        %s212 = scalar_lea.vmem %s3, %s211
        %p213 = scmp.eq.s32.totalorder %s17, 0
        %v214 = vld [vmem:[%s174] sm:$0x1]
        %v215 = vld [vmem:[%s204] sm:$0x1]
        %v216 = vld [vmem:[%s207] sm:$0x1]
        %s217 = scalar_select %p213, 0, 17
        %v219 = vlaneseq
        %v220 = vshrl.u32 %v219, 7
        %v221 = vsub.s32 0, %v220
        %v222 = vrot.slane %v215, %v221
        %v224 = vmul.f32 %v222, 0.0
        %v226 = vlaneseq
        %v227 = vshrl.u32 %v226, 7
        %v228 = vsub.s32 0, %v227
        %v229 = vrot.slane %v214, %v228
        %v231 = vadd.f32 %v229, %v224
        %v232 = vxor.u32 %v231, 2147483648
        %v233 = vmul.f32 %v232, 1.442695
        %v234 = vpow.pop %v233
        %v235 = vadd.f32 %v234, 1.0
        %v236 = vrcp.pop %v235
        %v237 = vmul.f32 1.0, %v236
        %v238 = vtanh.pop %v231
        %v239 = vmul.f32 %v237, 0.0
        %241 = vrot.lane.b32.xlu0 %v238, 126
        %v242 = vpop.permute.xlu0 %241
        %v244 = vmul.f32 %v237, %v242
        %246 = vrot.lane.b32.xlu0 %v244, 1
        %v247 = vpop.permute.xlu0 %246
        %v249 = vadd.f32 %v239, %v247
        %v250 = vtanh.pop %v249
        %252 = vrot.lane.b32.xlu0 %v250, 2
        %v253 = vpop.permute.xlu0 %252
        %v255 = vmul.f32 %v237, %v253
        %257 = vset.pattern.permute.xlu0 3
        %258 = vperm.xlu0 %257, %v255
        %v259 = vpop.permute.xlu0 %258
        %v262 = vlaneseq
        %v263 = vshrl.u32 %v262, 7
        %v264 = vsub.s32 0, %v263
        %v265 = vrot.slane %v216, %v264
        %v267 = vmul.f32 %v259, %v265
        %s268 = smul.u32 %s217, 2
        %s269 = scalar_lea.vmem %s212, %s268
        %vm270 = vcmask 25600
        %271 = vst.msk [vmem:[%s269] sm:$0x3] %vm270, %v267
        %s272 = scalar_select %p213, 1, 16
        %v273 = vmul.f32 %v259, %v222
        %v274 = vadd.f32 %v229, %v273
        %v275 = vxor.u32 %v274, 2147483648
        %v276 = vmul.f32 %v275, 1.442695
        %v277 = vpow.pop %v276
        %v278 = vadd.f32 %v277, 1.0
        %v279 = vrcp.pop %v278
        %v280 = vmul.f32 1.0, %v279
        %v281 = vtanh.pop %v274
        %v282 = vmul.f32 %v280, %v249
        %284 = vrot.lane.b32.xlu0 %v281, 126
        %v285 = vpop.permute.xlu0 %284
        %v287 = vmul.f32 %v280, %v285
        %289 = vrot.lane.b32.xlu0 %v287, 1
        %v290 = vpop.permute.xlu0 %289
        %v292 = vadd.f32 %v282, %v290
        %v293 = vtanh.pop %v292
        %295 = vrot.lane.b32.xlu0 %v293, 2
        %v296 = vpop.permute.xlu0 %295
        %v298 = vmul.f32 %v280, %v296
        %300 = vset.pattern.permute.xlu0 3
        %301 = vperm.xlu0 %300, %v298
        %v302 = vpop.permute.xlu0 %301
        %v304 = vmul.f32 %v302, %v265
        %s305 = smul.u32 %s272, 2
        %s306 = scalar_lea.vmem %s212, %s305
        %307 = vst.msk [vmem:[%s306] sm:$0x3] %vm270, %v304
        %s308 = scalar_select %p213, 2, 15
        %v309 = vmul.f32 %v302, %v222
        %v310 = vadd.f32 %v229, %v309
        %v311 = vxor.u32 %v310, 2147483648
        %v312 = vmul.f32 %v311, 1.442695
        %v313 = vpow.pop %v312
        %v314 = vadd.f32 %v313, 1.0
        %v315 = vrcp.pop %v314
        %v316 = vmul.f32 1.0, %v315
        %v317 = vtanh.pop %v310
        %v318 = vmul.f32 %v316, %v292
        %320 = vrot.lane.b32.xlu0 %v317, 126
        %v321 = vpop.permute.xlu0 %320
        %v323 = vmul.f32 %v316, %v321
        %325 = vrot.lane.b32.xlu0 %v323, 1
        %v326 = vpop.permute.xlu0 %325
        %v328 = vadd.f32 %v318, %v326
        %v329 = vtanh.pop %v328
        %331 = vrot.lane.b32.xlu0 %v329, 2
        %v332 = vpop.permute.xlu0 %331
        %v334 = vmul.f32 %v316, %v332
        %336 = vset.pattern.permute.xlu0 3
        %337 = vperm.xlu0 %336, %v334
        %v338 = vpop.permute.xlu0 %337
        %v340 = vmul.f32 %v338, %v265
        %s341 = smul.u32 %s308, 2
        %s342 = scalar_lea.vmem %s212, %s341
        %343 = vst.msk [vmem:[%s342] sm:$0x3] %vm270, %v340
        %s344 = scalar_select %p213, 3, 14
        %v345 = vmul.f32 %v338, %v222
        %v346 = vadd.f32 %v229, %v345
        %v347 = vxor.u32 %v346, 2147483648
        %v348 = vmul.f32 %v347, 1.442695
        %v349 = vpow.pop %v348
        %v350 = vadd.f32 %v349, 1.0
        %v351 = vrcp.pop %v350
        %v352 = vmul.f32 1.0, %v351
        %v353 = vtanh.pop %v346
        %v354 = vmul.f32 %v352, %v328
        %356 = vrot.lane.b32.xlu0 %v353, 126
        %v357 = vpop.permute.xlu0 %356
        %v359 = vmul.f32 %v352, %v357
        %361 = vrot.lane.b32.xlu0 %v359, 1
        %v362 = vpop.permute.xlu0 %361
        %v364 = vadd.f32 %v354, %v362
        %v365 = vtanh.pop %v364
        %367 = vrot.lane.b32.xlu0 %v365, 2
        %v368 = vpop.permute.xlu0 %367
        %v370 = vmul.f32 %v352, %v368
        %372 = vset.pattern.permute.xlu0 3
        %373 = vperm.xlu0 %372, %v370
        %v374 = vpop.permute.xlu0 %373
        %v376 = vmul.f32 %v374, %v265
        %s377 = smul.u32 %s344, 2
        %s378 = scalar_lea.vmem %s212, %s377
        %379 = vst.msk [vmem:[%s378] sm:$0x3] %vm270, %v376
        %s380 = scalar_select %p213, 4, 13
        %v381 = vmul.f32 %v374, %v222
        %v382 = vadd.f32 %v229, %v381
        %v383 = vxor.u32 %v382, 2147483648
        %v384 = vmul.f32 %v383, 1.442695
        %v385 = vpow.pop %v384
        %v386 = vadd.f32 %v385, 1.0
        %v387 = vrcp.pop %v386
        %v388 = vmul.f32 1.0, %v387
        %v389 = vtanh.pop %v382
        %v390 = vmul.f32 %v388, %v364
        %392 = vrot.lane.b32.xlu0 %v389, 126
        %v393 = vpop.permute.xlu0 %392
        %v395 = vmul.f32 %v388, %v393
        %397 = vrot.lane.b32.xlu0 %v395, 1
        %v398 = vpop.permute.xlu0 %397
        %v400 = vadd.f32 %v390, %v398
        %v401 = vtanh.pop %v400
        %403 = vrot.lane.b32.xlu0 %v401, 2
        %v404 = vpop.permute.xlu0 %403
        %v406 = vmul.f32 %v388, %v404
        %408 = vset.pattern.permute.xlu0 3
        %409 = vperm.xlu0 %408, %v406
        %v410 = vpop.permute.xlu0 %409
        %v412 = vmul.f32 %v410, %v265
        %s413 = smul.u32 %s380, 2
        %s414 = scalar_lea.vmem %s212, %s413
        %415 = vst.msk [vmem:[%s414] sm:$0x3] %vm270, %v412
        %s416 = scalar_select %p213, 5, 12
        %v417 = vmul.f32 %v410, %v222
        %v418 = vadd.f32 %v229, %v417
        %v419 = vxor.u32 %v418, 2147483648
        %v420 = vmul.f32 %v419, 1.442695
        %v421 = vpow.pop %v420
        %v422 = vadd.f32 %v421, 1.0
        %v423 = vrcp.pop %v422
        %v424 = vmul.f32 1.0, %v423
        %v425 = vtanh.pop %v418
        %v426 = vmul.f32 %v424, %v400
        %428 = vrot.lane.b32.xlu0 %v425, 126
        %v429 = vpop.permute.xlu0 %428
        %v431 = vmul.f32 %v424, %v429
        %433 = vrot.lane.b32.xlu0 %v431, 1
        %v434 = vpop.permute.xlu0 %433
        %v436 = vadd.f32 %v426, %v434
        %v437 = vtanh.pop %v436
        %439 = vrot.lane.b32.xlu0 %v437, 2
        %v440 = vpop.permute.xlu0 %439
        %v442 = vmul.f32 %v424, %v440
        %444 = vset.pattern.permute.xlu0 3
        %445 = vperm.xlu0 %444, %v442
        %v446 = vpop.permute.xlu0 %445
        %v448 = vmul.f32 %v446, %v265
        %s449 = smul.u32 %s416, 2
        %s450 = scalar_lea.vmem %s212, %s449
        %451 = vst.msk [vmem:[%s450] sm:$0x3] %vm270, %v448
        %s452 = scalar_select %p213, 6, 11
        %v453 = vmul.f32 %v446, %v222
        %v454 = vadd.f32 %v229, %v453
        %v455 = vxor.u32 %v454, 2147483648
        %v456 = vmul.f32 %v455, 1.442695
        %v457 = vpow.pop %v456
        %v458 = vadd.f32 %v457, 1.0
        %v459 = vrcp.pop %v458
        %v460 = vmul.f32 1.0, %v459
        %v461 = vtanh.pop %v454
        %v462 = vmul.f32 %v460, %v436
        %464 = vrot.lane.b32.xlu0 %v461, 126
        %v465 = vpop.permute.xlu0 %464
        %v467 = vmul.f32 %v460, %v465
        %469 = vrot.lane.b32.xlu0 %v467, 1
        %v470 = vpop.permute.xlu0 %469
        %v472 = vadd.f32 %v462, %v470
        %v473 = vtanh.pop %v472
        %475 = vrot.lane.b32.xlu0 %v473, 2
        %v476 = vpop.permute.xlu0 %475
        %v478 = vmul.f32 %v460, %v476
        %480 = vset.pattern.permute.xlu0 3
        %481 = vperm.xlu0 %480, %v478
        %v482 = vpop.permute.xlu0 %481
        %v484 = vmul.f32 %v482, %v265
        %s485 = smul.u32 %s452, 2
        %s486 = scalar_lea.vmem %s212, %s485
        %487 = vst.msk [vmem:[%s486] sm:$0x3] %vm270, %v484
        %s488 = scalar_select %p213, 7, 10
        %v489 = vmul.f32 %v482, %v222
        %v490 = vadd.f32 %v229, %v489
        %v491 = vxor.u32 %v490, 2147483648
        %v492 = vmul.f32 %v491, 1.442695
        %v493 = vpow.pop %v492
        %v494 = vadd.f32 %v493, 1.0
        %v495 = vrcp.pop %v494
        %v496 = vmul.f32 1.0, %v495
        %v497 = vtanh.pop %v490
        %v498 = vmul.f32 %v496, %v472
        %500 = vrot.lane.b32.xlu0 %v497, 126
        %v501 = vpop.permute.xlu0 %500
        %v503 = vmul.f32 %v496, %v501
        %505 = vrot.lane.b32.xlu0 %v503, 1
        %v506 = vpop.permute.xlu0 %505
        %v508 = vadd.f32 %v498, %v506
        %v509 = vtanh.pop %v508
        %511 = vrot.lane.b32.xlu0 %v509, 2
        %v512 = vpop.permute.xlu0 %511
        %v514 = vmul.f32 %v496, %v512
        %516 = vset.pattern.permute.xlu0 3
        %517 = vperm.xlu0 %516, %v514
        %v518 = vpop.permute.xlu0 %517
        %v520 = vmul.f32 %v518, %v265
        %s521 = smul.u32 %s488, 2
        %s522 = scalar_lea.vmem %s212, %s521
        %523 = vst.msk [vmem:[%s522] sm:$0x3] %vm270, %v520
        %s524 = scalar_select %p213, 8, 9
        %v525 = vmul.f32 %v518, %v222
        %v526 = vadd.f32 %v229, %v525
        %v527 = vxor.u32 %v526, 2147483648
        %v528 = vmul.f32 %v527, 1.442695
        %v529 = vpow.pop %v528
        %v530 = vadd.f32 %v529, 1.0
        %v531 = vrcp.pop %v530
        %v532 = vmul.f32 1.0, %v531
        %v533 = vtanh.pop %v526
        %v534 = vmul.f32 %v532, %v508
        %536 = vrot.lane.b32.xlu0 %v533, 126
        %v537 = vpop.permute.xlu0 %536
        %v539 = vmul.f32 %v532, %v537
        %541 = vrot.lane.b32.xlu0 %v539, 1
        %v542 = vpop.permute.xlu0 %541
        %v544 = vadd.f32 %v534, %v542
        %v545 = vtanh.pop %v544
        %547 = vrot.lane.b32.xlu0 %v545, 2
        %v548 = vpop.permute.xlu0 %547
        %v550 = vmul.f32 %v532, %v548
        %552 = vset.pattern.permute.xlu0 3
        %553 = vperm.xlu0 %552, %v550
        %v554 = vpop.permute.xlu0 %553
        %v556 = vmul.f32 %v554, %v265
        %s557 = smul.u32 %s524, 2
        %s558 = scalar_lea.vmem %s212, %s557
        %559 = vst.msk [vmem:[%s558] sm:$0x3] %vm270, %v556
        %s560 = scalar_select %p213, 9, 8
        %v561 = vmul.f32 %v554, %v222
        %v562 = vadd.f32 %v229, %v561
        %v563 = vxor.u32 %v562, 2147483648
        %v564 = vmul.f32 %v563, 1.442695
        %v565 = vpow.pop %v564
        %v566 = vadd.f32 %v565, 1.0
        %v567 = vrcp.pop %v566
        %v568 = vmul.f32 1.0, %v567
        %v569 = vtanh.pop %v562
        %v570 = vmul.f32 %v568, %v544
        %572 = vrot.lane.b32.xlu0 %v569, 126
        %v573 = vpop.permute.xlu0 %572
        %v575 = vmul.f32 %v568, %v573
        %577 = vrot.lane.b32.xlu0 %v575, 1
        %v578 = vpop.permute.xlu0 %577
        %v580 = vadd.f32 %v570, %v578
        %v581 = vtanh.pop %v580
        %583 = vrot.lane.b32.xlu0 %v581, 2
        %v584 = vpop.permute.xlu0 %583
        %v586 = vmul.f32 %v568, %v584
        %588 = vset.pattern.permute.xlu0 3
        %589 = vperm.xlu0 %588, %v586
        %v590 = vpop.permute.xlu0 %589
        %v592 = vmul.f32 %v590, %v265
        %s593 = smul.u32 %s560, 2
        %s594 = scalar_lea.vmem %s212, %s593
        %595 = vst.msk [vmem:[%s594] sm:$0x3] %vm270, %v592
        %s596 = scalar_select %p213, 10, 7
        %v597 = vmul.f32 %v590, %v222
        %v598 = vadd.f32 %v229, %v597
        %v599 = vxor.u32 %v598, 2147483648
        %v600 = vmul.f32 %v599, 1.442695
        %v601 = vpow.pop %v600
        %v602 = vadd.f32 %v601, 1.0
        %v603 = vrcp.pop %v602
        %v604 = vmul.f32 1.0, %v603
        %v605 = vtanh.pop %v598
        %v606 = vmul.f32 %v604, %v580
        %608 = vrot.lane.b32.xlu0 %v605, 126
        %v609 = vpop.permute.xlu0 %608
        %v611 = vmul.f32 %v604, %v609
        %613 = vrot.lane.b32.xlu0 %v611, 1
        %v614 = vpop.permute.xlu0 %613
        %v616 = vadd.f32 %v606, %v614
        %v617 = vtanh.pop %v616
        %619 = vrot.lane.b32.xlu0 %v617, 2
        %v620 = vpop.permute.xlu0 %619
        %v622 = vmul.f32 %v604, %v620
        %624 = vset.pattern.permute.xlu0 3
        %625 = vperm.xlu0 %624, %v622
        %v626 = vpop.permute.xlu0 %625
        %v628 = vmul.f32 %v626, %v265
        %s629 = smul.u32 %s596, 2
        %s630 = scalar_lea.vmem %s212, %s629
        %631 = vst.msk [vmem:[%s630] sm:$0x3] %vm270, %v628
        %s632 = scalar_select %p213, 11, 6
        %v633 = vmul.f32 %v626, %v222
        %v634 = vadd.f32 %v229, %v633
        %v635 = vxor.u32 %v634, 2147483648
        %v636 = vmul.f32 %v635, 1.442695
        %v637 = vpow.pop %v636
        %v638 = vadd.f32 %v637, 1.0
        %v639 = vrcp.pop %v638
        %v640 = vmul.f32 1.0, %v639
        %v641 = vtanh.pop %v634
        %v642 = vmul.f32 %v640, %v616
        %644 = vrot.lane.b32.xlu0 %v641, 126
        %v645 = vpop.permute.xlu0 %644
        %v647 = vmul.f32 %v640, %v645
        %649 = vrot.lane.b32.xlu0 %v647, 1
        %v650 = vpop.permute.xlu0 %649
        %v652 = vadd.f32 %v642, %v650
        %v653 = vtanh.pop %v652
        %655 = vrot.lane.b32.xlu0 %v653, 2
        %v656 = vpop.permute.xlu0 %655
        %v658 = vmul.f32 %v640, %v656
        %660 = vset.pattern.permute.xlu0 3
        %661 = vperm.xlu0 %660, %v658
        %v662 = vpop.permute.xlu0 %661
        %v664 = vmul.f32 %v662, %v265
        %s665 = smul.u32 %s632, 2
        %s666 = scalar_lea.vmem %s212, %s665
        %667 = vst.msk [vmem:[%s666] sm:$0x3] %vm270, %v664
        %s668 = scalar_select %p213, 12, 5
        %v669 = vmul.f32 %v662, %v222
        %v670 = vadd.f32 %v229, %v669
        %v671 = vxor.u32 %v670, 2147483648
        %v672 = vmul.f32 %v671, 1.442695
        %v673 = vpow.pop %v672
        %v674 = vadd.f32 %v673, 1.0
        %v675 = vrcp.pop %v674
        %v676 = vmul.f32 1.0, %v675
        %v677 = vtanh.pop %v670
        %v678 = vmul.f32 %v676, %v652
        %680 = vrot.lane.b32.xlu0 %v677, 126
        %v681 = vpop.permute.xlu0 %680
        %v683 = vmul.f32 %v676, %v681
        %685 = vrot.lane.b32.xlu0 %v683, 1
        %v686 = vpop.permute.xlu0 %685
        %v688 = vadd.f32 %v678, %v686
        %v689 = vtanh.pop %v688
        %691 = vrot.lane.b32.xlu0 %v689, 2
        %v692 = vpop.permute.xlu0 %691
        %v694 = vmul.f32 %v676, %v692
        %696 = vset.pattern.permute.xlu0 3
        %697 = vperm.xlu0 %696, %v694
        %v698 = vpop.permute.xlu0 %697
        %v700 = vmul.f32 %v698, %v265
        %s701 = smul.u32 %s668, 2
        %s702 = scalar_lea.vmem %s212, %s701
        %703 = vst.msk [vmem:[%s702] sm:$0x3] %vm270, %v700
        %s704 = scalar_select %p213, 13, 4
        %v705 = vmul.f32 %v698, %v222
        %v706 = vadd.f32 %v229, %v705
        %v707 = vxor.u32 %v706, 2147483648
        %v708 = vmul.f32 %v707, 1.442695
        %v709 = vpow.pop %v708
        %v710 = vadd.f32 %v709, 1.0
        %v711 = vrcp.pop %v710
        %v712 = vmul.f32 1.0, %v711
        %v713 = vtanh.pop %v706
        %v714 = vmul.f32 %v712, %v688
        %716 = vrot.lane.b32.xlu0 %v713, 126
        %v717 = vpop.permute.xlu0 %716
        %v719 = vmul.f32 %v712, %v717
        %721 = vrot.lane.b32.xlu0 %v719, 1
        %v722 = vpop.permute.xlu0 %721
        %v724 = vadd.f32 %v714, %v722
        %v725 = vtanh.pop %v724
        %727 = vrot.lane.b32.xlu0 %v725, 2
        %v728 = vpop.permute.xlu0 %727
        %v730 = vmul.f32 %v712, %v728
        %732 = vset.pattern.permute.xlu0 3
        %733 = vperm.xlu0 %732, %v730
        %v734 = vpop.permute.xlu0 %733
        %v736 = vmul.f32 %v734, %v265
        %s737 = smul.u32 %s704, 2
        %s738 = scalar_lea.vmem %s212, %s737
        %739 = vst.msk [vmem:[%s738] sm:$0x3] %vm270, %v736
        %s740 = scalar_select %p213, 14, 3
        %v741 = vmul.f32 %v734, %v222
        %v742 = vadd.f32 %v229, %v741
        %v743 = vxor.u32 %v742, 2147483648
        %v744 = vmul.f32 %v743, 1.442695
        %v745 = vpow.pop %v744
        %v746 = vadd.f32 %v745, 1.0
        %v747 = vrcp.pop %v746
        %v748 = vmul.f32 1.0, %v747
        %v749 = vtanh.pop %v742
        %v750 = vmul.f32 %v748, %v724
        %752 = vrot.lane.b32.xlu0 %v749, 126
        %v753 = vpop.permute.xlu0 %752
        %v755 = vmul.f32 %v748, %v753
        %757 = vrot.lane.b32.xlu0 %v755, 1
        %v758 = vpop.permute.xlu0 %757
        %v760 = vadd.f32 %v750, %v758
        %v761 = vtanh.pop %v760
        %763 = vrot.lane.b32.xlu0 %v761, 2
        %v764 = vpop.permute.xlu0 %763
        %v766 = vmul.f32 %v748, %v764
        %768 = vset.pattern.permute.xlu0 3
        %769 = vperm.xlu0 %768, %v766
        %v770 = vpop.permute.xlu0 %769
        %v772 = vmul.f32 %v770, %v265
        %s773 = smul.u32 %s740, 2
        %s774 = scalar_lea.vmem %s212, %s773
        %775 = vst.msk [vmem:[%s774] sm:$0x3] %vm270, %v772
        %s776 = scalar_select %p213, 15, 2
        %v777 = vmul.f32 %v770, %v222
        %v778 = vadd.f32 %v229, %v777
        %v779 = vxor.u32 %v778, 2147483648
        %v780 = vmul.f32 %v779, 1.442695
        %v781 = vpow.pop %v780
        %v782 = vadd.f32 %v781, 1.0
        %v783 = vrcp.pop %v782
        %v784 = vmul.f32 1.0, %v783
        %v785 = vtanh.pop %v778
        %v786 = vmul.f32 %v784, %v760
        %788 = vrot.lane.b32.xlu0 %v785, 126
        %v789 = vpop.permute.xlu0 %788
        %v791 = vmul.f32 %v784, %v789
        %793 = vrot.lane.b32.xlu0 %v791, 1
        %v794 = vpop.permute.xlu0 %793
        %v796 = vadd.f32 %v786, %v794
        %v797 = vtanh.pop %v796
        %799 = vrot.lane.b32.xlu0 %v797, 2
        %v800 = vpop.permute.xlu0 %799
        %v802 = vmul.f32 %v784, %v800
        %804 = vset.pattern.permute.xlu0 3
        %805 = vperm.xlu0 %804, %v802
        %v806 = vpop.permute.xlu0 %805
        %v808 = vmul.f32 %v806, %v265
        %s809 = smul.u32 %s776, 2
        %s810 = scalar_lea.vmem %s212, %s809
        %811 = vst.msk [vmem:[%s810] sm:$0x3] %vm270, %v808
        %s812 = scalar_select %p213, 16, 1
        %v813 = vmul.f32 %v806, %v222
        %v814 = vadd.f32 %v229, %v813
        %v815 = vxor.u32 %v814, 2147483648
        %v816 = vmul.f32 %v815, 1.442695
        %v817 = vpow.pop %v816
        %v818 = vadd.f32 %v817, 1.0
        %v819 = vrcp.pop %v818
        %v820 = vmul.f32 1.0, %v819
        %v821 = vtanh.pop %v814
        %v822 = vmul.f32 %v820, %v796
        %824 = vrot.lane.b32.xlu0 %v821, 126
        %v825 = vpop.permute.xlu0 %824
        %v827 = vmul.f32 %v820, %v825
        %829 = vrot.lane.b32.xlu0 %v827, 1
        %v830 = vpop.permute.xlu0 %829
        %v832 = vadd.f32 %v822, %v830
        %v833 = vtanh.pop %v832
        %835 = vrot.lane.b32.xlu0 %v833, 2
        %v836 = vpop.permute.xlu0 %835
        %v838 = vmul.f32 %v820, %v836
        %840 = vset.pattern.permute.xlu0 3
        %841 = vperm.xlu0 %840, %v838
        %v842 = vpop.permute.xlu0 %841
        %v844 = vmul.f32 %v842, %v265
        %s845 = smul.u32 %s812, 2
        %s846 = scalar_lea.vmem %s212, %s845
        %847 = vst.msk [vmem:[%s846] sm:$0x3] %vm270, %v844
        %s848 = scalar_select %p213, 17, 0
        %v849 = vmul.f32 %v842, %v222
        %v850 = vadd.f32 %v229, %v849
        %v851 = vxor.u32 %v850, 2147483648
        %v852 = vmul.f32 %v851, 1.442695
        %v853 = vpow.pop %v852
        %v854 = vadd.f32 %v853, 1.0
        %v855 = vrcp.pop %v854
        %v856 = vmul.f32 1.0, %v855
        %v857 = vtanh.pop %v850
        %v858 = vmul.f32 %v856, %v832
        %860 = vrot.lane.b32.xlu0 %v857, 126
        %v861 = vpop.permute.xlu0 %860
        %v863 = vmul.f32 %v856, %v861
        %865 = vrot.lane.b32.xlu0 %v863, 1
        %v866 = vpop.permute.xlu0 %865
        %v868 = vadd.f32 %v858, %v866
        %v869 = vtanh.pop %v868
        %871 = vrot.lane.b32.xlu0 %v869, 2
        %v872 = vpop.permute.xlu0 %871
        %v874 = vmul.f32 %v856, %v872
        %876 = vset.pattern.permute.xlu0 3
        %877 = vperm.xlu0 %876, %v874
        %v878 = vpop.permute.xlu0 %877
        %v880 = vmul.f32 %v878, %v265
        %s881 = smul.u32 %s848, 2
        %s882 = scalar_lea.vmem %s212, %s881
        %883 = vst.msk [vmem:[%s882] sm:$0x3] %vm270, %v880
        %p884 = scmp.lt.s32.totalorder %s17, 1
        %s885 = scalar_select %p884, %s17, 1
        %s886 = smul.addr %s885, 18
        %s887 = smul.addr %s886, 2
        %s888 = scalar_lea.vmem %s3, %s887
        // Predicated region
        $region37: #{tpu_custom_call.1} parent=31 // pred_check
          %p889 = pneg %p113
        $region38: #{tpu_custom_call.1} parent=31 // pred_check_branch
          %891 = sbr.rel (%p889) target = $region40
        $region39: #{tpu_custom_call.1} parent=31 // pred_region
          _
        $region40: #{tpu_custom_call.1} parent=31 // pred_fallthru
          _
      $region32: #{tpu_custom_call.1} parent=5 // pred_fallthru
        _
      %p892 = scmp.le.s32.totalorder 2, %s12
      // Predicated region
      $region41: #{tpu_custom_call.1} parent=5 // pred_check
        %p893 = pneg %p892
      $region42: #{tpu_custom_call.1} parent=5 // pred_check_branch
        %895 = sbr.rel (%p893) target = $region44
      $region43: #{tpu_custom_call.1} parent=5 // pred_region
        %s896 = ssub.s32 %s12, 2
        // Predicated region
        $region45: #{tpu_custom_call.1} parent=43 // pred_check
          %p897 = pneg %p119
        $region46: #{tpu_custom_call.1} parent=43 // pred_check_branch
          %899 = sbr.rel (%p897) target = $region48
        $region47: #{tpu_custom_call.1} parent=43 // pred_region
          %p900 = scmp.lt.s32.totalorder %s18, 1
          %s901 = scalar_select %p900, %s18, 1
          %s902 = smul.addr %s901, 18
          %s903 = smul.addr %s902, 2
          %s904 = scalar_lea.vmem %s3, %s903
        $region48: #{tpu_custom_call.1} parent=43 // pred_fallthru
          _
      $region44: #{tpu_custom_call.1} parent=5 // pred_fallthru
        _
    $region6: #{tpu_custom_call.1} parent=1 // loop_footer
      %s16 = sadd.s32 1, %s12
    $region7: #{tpu_custom_call.1} parent=1 // loop_footer_branch
      %11 = sbr.rel target = $region3
    $region8: #{tpu_custom_call.1} parent=1 // loop_exit
      _
    %905 = vsyncpa [#allocation3], 1
    %s906 = scalar_lea.sflag [#allocation3], 1
    %907 = vsyncpa %s906, 1

</llo_original>
